<compile_context>
chip_gen: v7x
topology: tpu7x:2x2x1
jax: 0.10.0
libtpu: 0.0.40
codegen_flags: <defaults>
</compile_context>

<pallas_src>
import functools

import jax
import jax.numpy as jnp
import numpy as np
from jax import lax
from jax.experimental import pallas as pl
from jax.experimental.pallas import tpu as pltpu

B_TILE = 8  # one f32 sublane tile of batch rows per kernel instance


def lstm_predictor_kernel(x_ref, w_ih_ref, w_hh_ref, b_ref, w_out_ref,
                          b_out_ref, out_ref, xproj_ref, *, T, B):
    """One batch tile of the LSTM + last-timestep Linear.

    x_ref:     (1, T*B, I) bf16   time-major rows (row = t*B + b)
    w_ih_ref:  (I, 4H)  bf16      w_hh_ref: (H, 4H) bf16
    b_ref:     (1, 4H)  f32       (= b_ih + b_hh)
    w_out_ref: (H, Op)  bf16      b_out_ref: (1, Op) f32
    out_ref:   (B, Op)  f32
    xproj_ref: (T*B, 4H) f32 VMEM scratch
    """
    H = w_hh_ref.shape[0]

    # ---- Hoisted input projection (independent of h, off the serial path):
    # one bf16 MXU matmul, f32 accumulate, written directly into the scratch in
    # its final layout (no in-kernel reshape).
    xproj_ref[...] = (jnp.dot(x_ref[0], w_ih_ref[...],
                              preferred_element_type=jnp.float32)
                      + b_ref[...])

    def step(t, carry):
        h, c = carry
        # w_hh streamed from VMEM every step (not held live across the whole
        # unrolled loop -> no 32-vreg live range / spill risk).
        gates = xproj_ref[pl.ds(t * B, B)] + jnp.dot(
            h.astype(jnp.bfloat16), w_hh_ref[...],
            preferred_element_type=jnp.float32)
        i_g = jax.nn.sigmoid(gates[:, 0 * H:1 * H])   # each slice = one (8,128) vreg
        f_g = jax.nn.sigmoid(gates[:, 1 * H:2 * H])
        g_g = jnp.tanh(gates[:, 2 * H:3 * H])
        o_g = jax.nn.sigmoid(gates[:, 3 * H:4 * H])
        c = f_g * c + i_g * g_g
        h = o_g * jnp.tanh(c)
        return (h, c)

    h0 = jnp.zeros((B, H), jnp.float32)
    c0 = jnp.zeros((B, H), jnp.float32)
    h, _ = lax.fori_loop(0, T, step, (h0, c0), unroll=True)

    # Final projection on the last hidden state (lane-dense padded output).
    out_ref[...] = (jnp.dot(h.astype(jnp.bfloat16), w_out_ref[...],
                            preferred_element_type=jnp.float32)
                    + b_out_ref[...]).astype(out_ref.dtype)


def prepare_params(params):
    """One-time conversion of PyTorch-layout params to kernel layout."""
    w_ih, w_hh = params["w_ih"], params["w_hh"]
    b_ih, b_hh = params["b_ih"], params["b_hh"]
    w_out, b_out = params["w_out"], params["b_out"]
    H = w_hh.shape[1]
    O = w_out.shape[0]
    O_pad = pl.cdiv(O, 128) * 128

    w_out_t = jnp.zeros((H, O_pad), jnp.float32).at[:, :O].set(
        jnp.transpose(w_out).astype(jnp.float32)).astype(jnp.bfloat16)
    b_out_r = jnp.zeros((1, O_pad), jnp.float32).at[:, :O].set(
        b_out.reshape(1, O).astype(jnp.float32))

    return {
        "w_ih_t": jnp.transpose(w_ih).astype(jnp.bfloat16),   # (I, 4H) bf16
        "w_hh_t": jnp.transpose(w_hh).astype(jnp.bfloat16),   # (H, 4H) bf16
        "b_comb": (b_ih + b_hh).reshape(1, 4 * H).astype(jnp.float32),
        "w_out_t": w_out_t,                                   # (H, O_pad) bf16
        "b_out_r": b_out_r,                                   # (1, O_pad) f32
        "output_size": O,
    }


def lstm_behavior_predictor(x, prep):
    """x: (B, T, I) float32 (batch_first, like the PyTorch module)."""
    B, T, I = x.shape
    H = prep["w_hh_t"].shape[0]
    O = prep["output_size"]
    O_pad = prep["w_out_t"].shape[1]
    B_pad = max(B_TILE, pl.cdiv(B, B_TILE) * B_TILE)
    G = B_pad // B_TILE

    # Cheap per-call XLA glue: time-major, zero-pad batch, group into B_TILE-row
    # tiles, flatten (T, B_TILE) -> rows, cast to bf16 (MXU input only).
    x_tm = jnp.transpose(x, (1, 0, 2)).astype(jnp.float32)       # (T, B, I)
    if B_pad != B:
        x_tm = jnp.pad(x_tm, ((0, 0), (0, B_pad - B), (0, 0)))
    x_g = (x_tm.reshape(T, G, B_TILE, I)
               .transpose(1, 0, 2, 3)
               .reshape(G, T * B_TILE, I)
               .astype(jnp.bfloat16))

    kernel = functools.partial(lstm_predictor_kernel, T=T, B=B_TILE)
    out_shape = jax.ShapeDtypeStruct((B_pad, O_pad), jnp.float32)
    scratch = [pltpu.VMEM((T * B_TILE, 4 * H), jnp.float32)]
    args = (x_g, prep["w_ih_t"], prep["w_hh_t"], prep["b_comb"],
            prep["w_out_t"], prep["b_out_r"])

    if G == 1:
        # Single batch tile: no grid, everything resident in one invocation.
        full = lambda s: pl.BlockSpec(s, lambda: (0,) * len(s))
        out_pad = pl.pallas_call(
            kernel,
            out_shape=out_shape,
            grid=(),
            in_specs=[
                full((1, T * B_TILE, I)),
                full((I, 4 * H)),
                full((H, 4 * H)),
                full((1, 4 * H)),
                full((H, O_pad)),
                full((1, O_pad)),
            ],
            out_specs=full((B_pad, O_pad)),
            scratch_shapes=scratch,
        )(*args)
    else:
        # Batch >= 16: parallel grid over batch tiles (second TC on v7x).
        rep = lambda s: pl.BlockSpec(s, lambda g: (0,) * len(s))
        out_pad = pl.pallas_call(
            kernel,
            out_shape=out_shape,
            grid=(G,),
            in_specs=[
                pl.BlockSpec((1, T * B_TILE, I), lambda g: (g, 0, 0)),
                rep((I, 4 * H)),
                rep((H, 4 * H)),
                rep((1, 4 * H)),
                rep((H, O_pad)),
                rep((1, O_pad)),
            ],
            out_specs=pl.BlockSpec((B_TILE, O_pad), lambda g: (g, 0)),
            scratch_shapes=scratch,
            compiler_params=pltpu.CompilerParams(
                dimension_semantics=("parallel",)),
        )(*args)

    return out_pad[:B, :O]


def init_params(key, input_size=4, hidden_size=128, output_size=1):
    # PyTorch LSTM/Linear default init: U(-1/sqrt(H), 1/sqrt(H)).
    k = 1.0 / np.sqrt(hidden_size)
    keys = jax.random.split(key, 6)
    u = lambda kk, shape, bound: jax.random.uniform(
        kk, shape, jnp.float32, minval=-bound, maxval=bound)
    return {
        "w_ih": u(keys[0], (4 * hidden_size, input_size), k),
        "w_hh": u(keys[1], (4 * hidden_size, hidden_size), k),
        "b_ih": u(keys[2], (4 * hidden_size,), k),
        "b_hh": u(keys[3], (4 * hidden_size,), k),
        "w_out": u(keys[4], (output_size, hidden_size), k),
        "b_out": u(keys[5], (output_size,), k),
    }


def reference_forward(x, params):
    """Pure-JAX f32 reference mirroring torch.nn.LSTM + Linear semantics."""
    w_ih, w_hh = params["w_ih"], params["w_hh"]
    b = params["b_ih"] + params["b_hh"]
    H = w_hh.shape[1]
    B, T, I = x.shape
    h = jnp.zeros((B, H), jnp.float32)
    c = jnp.zeros((B, H), jnp.float32)
    for t in range(T):
        gates = x[:, t, :] @ w_ih.T + h @ w_hh.T + b
        i_g = jax.nn.sigmoid(gates[:, 0 * H:1 * H])
        f_g = jax.nn.sigmoid(gates[:, 1 * H:2 * H])
        g_g = jnp.tanh(gates[:, 2 * H:3 * H])
        o_g = jax.nn.sigmoid(gates[:, 3 * H:4 * H])
        c = f_g * c + i_g * g_g
        h = o_g * jnp.tanh(c)
    return h @ params["w_out"].T + params["b_out"]


if __name__ == "__main__":
    key = jax.random.PRNGKey(0)
    pkey, xkey, xkey2 = jax.random.split(key, 3)

    B, T, I, H, O = 2, 8, 4, 128, 1
    params = init_params(pkey, input_size=I, hidden_size=H, output_size=O)
    prep = prepare_params(params)

    # Small batch: single tile, grid=() path.
    x = jax.random.normal(xkey, (B, T, I), jnp.float32)
    out = jax.block_until_ready(lstm_behavior_predictor(x, prep))
    ref = reference_forward(x, params)
    # bf16 MXU operands (f32 accumulate) -> relaxed tolerance vs f32 reference.
    np.testing.assert_allclose(np.asarray(out), np.asarray(ref),
                               rtol=2e-2, atol=2e-2)

    # Larger batch: parallel batch-tile grid path (shards across TCs on v7x).
    x2 = jax.random.normal(xkey2, (20, T, I), jnp.float32)
    out2 = jax.block_until_ready(lstm_behavior_predictor(x2, prep))
    ref2 = reference_forward(x2, params)
    np.testing.assert_allclose(np.asarray(out2), np.asarray(ref2),
                               rtol=2e-2, atol=2e-2)

    print("KERNEL_OK")
</pallas_src>

<mosaic_0001>
module attributes {stable_mosaic.version = 11 : i64} {
  func.func @lstm_predictor_kernel(%arg0: memref<1x64x4xbf16, #tpu.memory_space<vmem>>, %arg1: memref<4x512xbf16, #tpu.memory_space<vmem>>, %arg2: memref<128x512xbf16, #tpu.memory_space<vmem>>, %arg3: memref<1x512xf32, #tpu.memory_space<vmem>>, %arg4: memref<128x128xbf16, #tpu.memory_space<vmem>>, %arg5: memref<1x128xf32, #tpu.memory_space<vmem>>, %arg6: memref<8x128xf32, #tpu.memory_space<vmem>>, %arg7: memref<64x512xf32, #tpu.memory_space<vmem>>) attributes {dimension_semantics = [], scalar_prefetch = 0 : i64, scratch_operands = 1 : i64, tpu.core_type = #tpu.core_type<tc>} {
    %c0 = arith.constant 0 : index
    %c0_0 = arith.constant 0 : index
    %c0_1 = arith.constant 0 : index
    %0 = vector.load %arg0[%c0, %c0_0, %c0_1] : memref<1x64x4xbf16, #tpu.memory_space<vmem>>, vector<1x64x4xbf16>
    %1 = vector.shape_cast %0 : vector<1x64x4xbf16> to vector<64x4xbf16>
    %c0_2 = arith.constant 0 : index
    %c0_3 = arith.constant 0 : index
    %2 = vector.load %arg1[%c0_2, %c0_3] : memref<4x512xbf16, #tpu.memory_space<vmem>>, vector<4x512xbf16>
    %cst = arith.constant dense<0.000000e+00> : vector<64x512xf32>
    %3 = tpu.matmul %1, %2, %cst {dimension_numbers = #tpu.dot_dimension_numbers<[1], [0], [0], [1], [0, 0, 1, 1], [], []>} : vector<64x4xbf16>, vector<4x512xbf16>, vector<64x512xf32> -> vector<64x512xf32>
    %c0_4 = arith.constant 0 : index
    %c0_5 = arith.constant 0 : index
    %4 = vector.load %arg3[%c0_4, %c0_5] : memref<1x512xf32, #tpu.memory_space<vmem>>, vector<1x512xf32>
    %5 = vector.broadcast %4 : vector<1x512xf32> to vector<64x512xf32>
    %6 = arith.addf %3, %5 : vector<64x512xf32>
    %c0_6 = arith.constant 0 : index
    %c0_7 = arith.constant 0 : index
    %7 = vector.load %arg7[%c0_6, %c0_7] : memref<64x512xf32, #tpu.memory_space<vmem>>, vector<64x512xf32>
    tpu.vector_store %arg7[%c0_6, %c0_7], %6 {strides = array<i32>} : memref<64x512xf32, #tpu.memory_space<vmem>>, vector<64x512xf32>,
    %cst_8 = arith.constant 0.000000e+00 : f32
    %8 = vector.broadcast %cst_8 : f32 to vector<8x128xf32>
    %cst_9 = arith.constant 0.000000e+00 : f32
    %9 = vector.broadcast %cst_9 : f32 to vector<8x128xf32>
    %c0_i32 = arith.constant 0 : i32
    %c8_i32 = arith.constant 8 : i32
    %10 = arith.muli %c0_i32, %c8_i32 : i32
    %11 = arith.index_cast %10 : i32 to index
    %c0_10 = arith.constant 0 : index
    %12 = vector.load %arg7[%11, %c0_10] : memref<64x512xf32, #tpu.memory_space<vmem>>, vector<8x512xf32>
    %13 = arith.truncf %8 : vector<8x128xf32> to vector<8x128xbf16>
    %c0_11 = arith.constant 0 : index
    %c0_12 = arith.constant 0 : index
    %14 = vector.load %arg2[%c0_11, %c0_12] : memref<128x512xbf16, #tpu.memory_space<vmem>>, vector<128x512xbf16>
    %cst_13 = arith.constant dense<0.000000e+00> : vector<8x512xf32>
    %15 = tpu.matmul %13, %14, %cst_13 {dimension_numbers = #tpu.dot_dimension_numbers<[1], [0], [0], [1], [0, 0, 1, 1], [], []>} : vector<8x128xbf16>, vector<128x512xbf16>, vector<8x512xf32> -> vector<8x512xf32>
    %16 = arith.addf %12, %15 : vector<8x512xf32>
    %17 = vector.extract_strided_slice %16 {offsets = [0, 0], sizes = [8, 128], strides = [1, 1]} : vector<8x512xf32> to vector<8x128xf32>
    %18 = arith.negf %17 : vector<8x128xf32>
    %19 = math.exp %18 : vector<8x128xf32>
    %cst_14 = arith.constant 1.000000e+00 : f32
    %20 = vector.broadcast %cst_14 : f32 to vector<8x128xf32>
    %21 = arith.addf %20, %19 : vector<8x128xf32>
    %22 = arith.divf %20, %21 : vector<8x128xf32>
    %23 = vector.extract_strided_slice %16 {offsets = [0, 128], sizes = [8, 128], strides = [1, 1]} : vector<8x512xf32> to vector<8x128xf32>
    %24 = arith.negf %23 : vector<8x128xf32>
    %25 = math.exp %24 : vector<8x128xf32>
    %cst_15 = arith.constant 1.000000e+00 : f32
    %26 = vector.broadcast %cst_15 : f32 to vector<8x128xf32>
    %27 = arith.addf %26, %25 : vector<8x128xf32>
    %28 = arith.divf %26, %27 : vector<8x128xf32>
    %29 = vector.extract_strided_slice %16 {offsets = [0, 256], sizes = [8, 128], strides = [1, 1]} : vector<8x512xf32> to vector<8x128xf32>
    %30 = math.tanh %29 : vector<8x128xf32>
    %31 = vector.extract_strided_slice %16 {offsets = [0, 384], sizes = [8, 128], strides = [1, 1]} : vector<8x512xf32> to vector<8x128xf32>
    %32 = arith.negf %31 : vector<8x128xf32>
    %33 = math.exp %32 : vector<8x128xf32>
    %cst_16 = arith.constant 1.000000e+00 : f32
    %34 = vector.broadcast %cst_16 : f32 to vector<8x128xf32>
    %35 = arith.addf %34, %33 : vector<8x128xf32>
    %36 = arith.divf %34, %35 : vector<8x128xf32>
    %37 = arith.mulf %28, %9 : vector<8x128xf32>
    %38 = arith.mulf %22, %30 : vector<8x128xf32>
    %39 = arith.addf %37, %38 : vector<8x128xf32>
    %40 = math.tanh %39 : vector<8x128xf32>
    %41 = arith.mulf %36, %40 : vector<8x128xf32>
    %c1_i32 = arith.constant 1 : i32
    %c8_i32_17 = arith.constant 8 : i32
    %42 = arith.muli %c1_i32, %c8_i32_17 : i32
    %43 = arith.index_cast %42 : i32 to index
    %c0_18 = arith.constant 0 : index
    %44 = vector.load %arg7[%43, %c0_18] : memref<64x512xf32, #tpu.memory_space<vmem>>, vector<8x512xf32>
    %45 = arith.truncf %41 : vector<8x128xf32> to vector<8x128xbf16>
    %c0_19 = arith.constant 0 : index
    %c0_20 = arith.constant 0 : index
    %46 = vector.load %arg2[%c0_19, %c0_20] : memref<128x512xbf16, #tpu.memory_space<vmem>>, vector<128x512xbf16>
    %cst_21 = arith.constant dense<0.000000e+00> : vector<8x512xf32>
    %47 = tpu.matmul %45, %46, %cst_21 {dimension_numbers = #tpu.dot_dimension_numbers<[1], [0], [0], [1], [0, 0, 1, 1], [], []>} : vector<8x128xbf16>, vector<128x512xbf16>, vector<8x512xf32> -> vector<8x512xf32>
    %48 = arith.addf %44, %47 : vector<8x512xf32>
    %49 = vector.extract_strided_slice %48 {offsets = [0, 0], sizes = [8, 128], strides = [1, 1]} : vector<8x512xf32> to vector<8x128xf32>
    %50 = arith.negf %49 : vector<8x128xf32>
    %51 = math.exp %50 : vector<8x128xf32>
    %cst_22 = arith.constant 1.000000e+00 : f32
    %52 = vector.broadcast %cst_22 : f32 to vector<8x128xf32>
    %53 = arith.addf %52, %51 : vector<8x128xf32>
    %54 = arith.divf %52, %53 : vector<8x128xf32>
    %55 = vector.extract_strided_slice %48 {offsets = [0, 128], sizes = [8, 128], strides = [1, 1]} : vector<8x512xf32> to vector<8x128xf32>
    %56 = arith.negf %55 : vector<8x128xf32>
    %57 = math.exp %56 : vector<8x128xf32>
    %cst_23 = arith.constant 1.000000e+00 : f32
    %58 = vector.broadcast %cst_23 : f32 to vector<8x128xf32>
    %59 = arith.addf %58, %57 : vector<8x128xf32>
    %60 = arith.divf %58, %59 : vector<8x128xf32>
    %61 = vector.extract_strided_slice %48 {offsets = [0, 256], sizes = [8, 128], strides = [1, 1]} : vector<8x512xf32> to vector<8x128xf32>
    %62 = math.tanh %61 : vector<8x128xf32>
    %63 = vector.extract_strided_slice %48 {offsets = [0, 384], sizes = [8, 128], strides = [1, 1]} : vector<8x512xf32> to vector<8x128xf32>
    %64 = arith.negf %63 : vector<8x128xf32>
    %65 = math.exp %64 : vector<8x128xf32>
    %cst_24 = arith.constant 1.000000e+00 : f32
    %66 = vector.broadcast %cst_24 : f32 to vector<8x128xf32>
    %67 = arith.addf %66, %65 : vector<8x128xf32>
    %68 = arith.divf %66, %67 : vector<8x128xf32>
    %69 = arith.mulf %60, %39 : vector<8x128xf32>
    %70 = arith.mulf %54, %62 : vector<8x128xf32>
    %71 = arith.addf %69, %70 : vector<8x128xf32>
    %72 = math.tanh %71 : vector<8x128xf32>
    %73 = arith.mulf %68, %72 : vector<8x128xf32>
    %c2_i32 = arith.constant 2 : i32
    %c8_i32_25 = arith.constant 8 : i32
    %74 = arith.muli %c2_i32, %c8_i32_25 : i32
    %75 = arith.index_cast %74 : i32 to index
    %c0_26 = arith.constant 0 : index
    %76 = vector.load %arg7[%75, %c0_26] : memref<64x512xf32, #tpu.memory_space<vmem>>, vector<8x512xf32>
    %77 = arith.truncf %73 : vector<8x128xf32> to vector<8x128xbf16>
    %c0_27 = arith.constant 0 : index
    %c0_28 = arith.constant 0 : index
    %78 = vector.load %arg2[%c0_27, %c0_28] : memref<128x512xbf16, #tpu.memory_space<vmem>>, vector<128x512xbf16>
    %cst_29 = arith.constant dense<0.000000e+00> : vector<8x512xf32>
    %79 = tpu.matmul %77, %78, %cst_29 {dimension_numbers = #tpu.dot_dimension_numbers<[1], [0], [0], [1], [0, 0, 1, 1], [], []>} : vector<8x128xbf16>, vector<128x512xbf16>, vector<8x512xf32> -> vector<8x512xf32>
    %80 = arith.addf %76, %79 : vector<8x512xf32>
    %81 = vector.extract_strided_slice %80 {offsets = [0, 0], sizes = [8, 128], strides = [1, 1]} : vector<8x512xf32> to vector<8x128xf32>
    %82 = arith.negf %81 : vector<8x128xf32>
    %83 = math.exp %82 : vector<8x128xf32>
    %cst_30 = arith.constant 1.000000e+00 : f32
    %84 = vector.broadcast %cst_30 : f32 to vector<8x128xf32>
    %85 = arith.addf %84, %83 : vector<8x128xf32>
    %86 = arith.divf %84, %85 : vector<8x128xf32>
    %87 = vector.extract_strided_slice %80 {offsets = [0, 128], sizes = [8, 128], strides = [1, 1]} : vector<8x512xf32> to vector<8x128xf32>
    %88 = arith.negf %87 : vector<8x128xf32>
    %89 = math.exp %88 : vector<8x128xf32>
    %cst_31 = arith.constant 1.000000e+00 : f32
    %90 = vector.broadcast %cst_31 : f32 to vector<8x128xf32>
    %91 = arith.addf %90, %89 : vector<8x128xf32>
    %92 = arith.divf %90, %91 : vector<8x128xf32>
    %93 = vector.extract_strided_slice %80 {offsets = [0, 256], sizes = [8, 128], strides = [1, 1]} : vector<8x512xf32> to vector<8x128xf32>
    %94 = math.tanh %93 : vector<8x128xf32>
    %95 = vector.extract_strided_slice %80 {offsets = [0, 384], sizes = [8, 128], strides = [1, 1]} : vector<8x512xf32> to vector<8x128xf32>
    %96 = arith.negf %95 : vector<8x128xf32>
    %97 = math.exp %96 : vector<8x128xf32>
    %cst_32 = arith.constant 1.000000e+00 : f32
    %98 = vector.broadcast %cst_32 : f32 to vector<8x128xf32>
    %99 = arith.addf %98, %97 : vector<8x128xf32>
    %100 = arith.divf %98, %99 : vector<8x128xf32>
    %101 = arith.mulf %92, %71 : vector<8x128xf32>
    %102 = arith.mulf %86, %94 : vector<8x128xf32>
    %103 = arith.addf %101, %102 : vector<8x128xf32>
    %104 = math.tanh %103 : vector<8x128xf32>
    %105 = arith.mulf %100, %104 : vector<8x128xf32>
    %c3_i32 = arith.constant 3 : i32
    %c8_i32_33 = arith.constant 8 : i32
    %106 = arith.muli %c3_i32, %c8_i32_33 : i32
    %107 = arith.index_cast %106 : i32 to index
    %c0_34 = arith.constant 0 : index
    %108 = vector.load %arg7[%107, %c0_34] : memref<64x512xf32, #tpu.memory_space<vmem>>, vector<8x512xf32>
    %109 = arith.truncf %105 : vector<8x128xf32> to vector<8x128xbf16>
    %c0_35 = arith.constant 0 : index
    %c0_36 = arith.constant 0 : index
    %110 = vector.load %arg2[%c0_35, %c0_36] : memref<128x512xbf16, #tpu.memory_space<vmem>>, vector<128x512xbf16>
    %cst_37 = arith.constant dense<0.000000e+00> : vector<8x512xf32>
    %111 = tpu.matmul %109, %110, %cst_37 {dimension_numbers = #tpu.dot_dimension_numbers<[1], [0], [0], [1], [0, 0, 1, 1], [], []>} : vector<8x128xbf16>, vector<128x512xbf16>, vector<8x512xf32> -> vector<8x512xf32>
    %112 = arith.addf %108, %111 : vector<8x512xf32>
    %113 = vector.extract_strided_slice %112 {offsets = [0, 0], sizes = [8, 128], strides = [1, 1]} : vector<8x512xf32> to vector<8x128xf32>
    %114 = arith.negf %113 : vector<8x128xf32>
    %115 = math.exp %114 : vector<8x128xf32>
    %cst_38 = arith.constant 1.000000e+00 : f32
    %116 = vector.broadcast %cst_38 : f32 to vector<8x128xf32>
    %117 = arith.addf %116, %115 : vector<8x128xf32>
    %118 = arith.divf %116, %117 : vector<8x128xf32>
    %119 = vector.extract_strided_slice %112 {offsets = [0, 128], sizes = [8, 128], strides = [1, 1]} : vector<8x512xf32> to vector<8x128xf32>
    %120 = arith.negf %119 : vector<8x128xf32>
    %121 = math.exp %120 : vector<8x128xf32>
    %cst_39 = arith.constant 1.000000e+00 : f32
    %122 = vector.broadcast %cst_39 : f32 to vector<8x128xf32>
    %123 = arith.addf %122, %121 : vector<8x128xf32>
    %124 = arith.divf %122, %123 : vector<8x128xf32>
    %125 = vector.extract_strided_slice %112 {offsets = [0, 256], sizes = [8, 128], strides = [1, 1]} : vector<8x512xf32> to vector<8x128xf32>
    %126 = math.tanh %125 : vector<8x128xf32>
    %127 = vector.extract_strided_slice %112 {offsets = [0, 384], sizes = [8, 128], strides = [1, 1]} : vector<8x512xf32> to vector<8x128xf32>
    %128 = arith.negf %127 : vector<8x128xf32>
    %129 = math.exp %128 : vector<8x128xf32>
    %cst_40 = arith.constant 1.000000e+00 : f32
    %130 = vector.broadcast %cst_40 : f32 to vector<8x128xf32>
    %131 = arith.addf %130, %129 : vector<8x128xf32>
    %132 = arith.divf %130, %131 : vector<8x128xf32>
    %133 = arith.mulf %124, %103 : vector<8x128xf32>
    %134 = arith.mulf %118, %126 : vector<8x128xf32>
    %135 = arith.addf %133, %134 : vector<8x128xf32>
    %136 = math.tanh %135 : vector<8x128xf32>
    %137 = arith.mulf %132, %136 : vector<8x128xf32>
    %c4_i32 = arith.constant 4 : i32
    %c8_i32_41 = arith.constant 8 : i32
    %138 = arith.muli %c4_i32, %c8_i32_41 : i32
    %139 = arith.index_cast %138 : i32 to index
    %c0_42 = arith.constant 0 : index
    %140 = vector.load %arg7[%139, %c0_42] : memref<64x512xf32, #tpu.memory_space<vmem>>, vector<8x512xf32>
    %141 = arith.truncf %137 : vector<8x128xf32> to vector<8x128xbf16>
    %c0_43 = arith.constant 0 : index
    %c0_44 = arith.constant 0 : index
    %142 = vector.load %arg2[%c0_43, %c0_44] : memref<128x512xbf16, #tpu.memory_space<vmem>>, vector<128x512xbf16>
    %cst_45 = arith.constant dense<0.000000e+00> : vector<8x512xf32>
    %143 = tpu.matmul %141, %142, %cst_45 {dimension_numbers = #tpu.dot_dimension_numbers<[1], [0], [0], [1], [0, 0, 1, 1], [], []>} : vector<8x128xbf16>, vector<128x512xbf16>, vector<8x512xf32> -> vector<8x512xf32>
    %144 = arith.addf %140, %143 : vector<8x512xf32>
    %145 = vector.extract_strided_slice %144 {offsets = [0, 0], sizes = [8, 128], strides = [1, 1]} : vector<8x512xf32> to vector<8x128xf32>
    %146 = arith.negf %145 : vector<8x128xf32>
    %147 = math.exp %146 : vector<8x128xf32>
    %cst_46 = arith.constant 1.000000e+00 : f32
    %148 = vector.broadcast %cst_46 : f32 to vector<8x128xf32>
    %149 = arith.addf %148, %147 : vector<8x128xf32>
    %150 = arith.divf %148, %149 : vector<8x128xf32>
    %151 = vector.extract_strided_slice %144 {offsets = [0, 128], sizes = [8, 128], strides = [1, 1]} : vector<8x512xf32> to vector<8x128xf32>
    %152 = arith.negf %151 : vector<8x128xf32>
    %153 = math.exp %152 : vector<8x128xf32>
    %cst_47 = arith.constant 1.000000e+00 : f32
    %154 = vector.broadcast %cst_47 : f32 to vector<8x128xf32>
    %155 = arith.addf %154, %153 : vector<8x128xf32>
    %156 = arith.divf %154, %155 : vector<8x128xf32>
    %157 = vector.extract_strided_slice %144 {offsets = [0, 256], sizes = [8, 128], strides = [1, 1]} : vector<8x512xf32> to vector<8x128xf32>
    %158 = math.tanh %157 : vector<8x128xf32>
    %159 = vector.extract_strided_slice %144 {offsets = [0, 384], sizes = [8, 128], strides = [1, 1]} : vector<8x512xf32> to vector<8x128xf32>
    %160 = arith.negf %159 : vector<8x128xf32>
    %161 = math.exp %160 : vector<8x128xf32>
    %cst_48 = arith.constant 1.000000e+00 : f32
    %162 = vector.broadcast %cst_48 : f32 to vector<8x128xf32>
    %163 = arith.addf %162, %161 : vector<8x128xf32>
    %164 = arith.divf %162, %163 : vector<8x128xf32>
    %165 = arith.mulf %156, %135 : vector<8x128xf32>
    %166 = arith.mulf %150, %158 : vector<8x128xf32>
    %167 = arith.addf %165, %166 : vector<8x128xf32>
    %168 = math.tanh %167 : vector<8x128xf32>
    %169 = arith.mulf %164, %168 : vector<8x128xf32>
    %c5_i32 = arith.constant 5 : i32
    %c8_i32_49 = arith.constant 8 : i32
    %170 = arith.muli %c5_i32, %c8_i32_49 : i32
    %171 = arith.index_cast %170 : i32 to index
    %c0_50 = arith.constant 0 : index
    %172 = vector.load %arg7[%171, %c0_50] : memref<64x512xf32, #tpu.memory_space<vmem>>, vector<8x512xf32>
    %173 = arith.truncf %169 : vector<8x128xf32> to vector<8x128xbf16>
    %c0_51 = arith.constant 0 : index
    %c0_52 = arith.constant 0 : index
    %174 = vector.load %arg2[%c0_51, %c0_52] : memref<128x512xbf16, #tpu.memory_space<vmem>>, vector<128x512xbf16>
    %cst_53 = arith.constant dense<0.000000e+00> : vector<8x512xf32>
    %175 = tpu.matmul %173, %174, %cst_53 {dimension_numbers = #tpu.dot_dimension_numbers<[1], [0], [0], [1], [0, 0, 1, 1], [], []>} : vector<8x128xbf16>, vector<128x512xbf16>, vector<8x512xf32> -> vector<8x512xf32>
    %176 = arith.addf %172, %175 : vector<8x512xf32>
    %177 = vector.extract_strided_slice %176 {offsets = [0, 0], sizes = [8, 128], strides = [1, 1]} : vector<8x512xf32> to vector<8x128xf32>
    %178 = arith.negf %177 : vector<8x128xf32>
    %179 = math.exp %178 : vector<8x128xf32>
    %cst_54 = arith.constant 1.000000e+00 : f32
    %180 = vector.broadcast %cst_54 : f32 to vector<8x128xf32>
    %181 = arith.addf %180, %179 : vector<8x128xf32>
    %182 = arith.divf %180, %181 : vector<8x128xf32>
    %183 = vector.extract_strided_slice %176 {offsets = [0, 128], sizes = [8, 128], strides = [1, 1]} : vector<8x512xf32> to vector<8x128xf32>
    %184 = arith.negf %183 : vector<8x128xf32>
    %185 = math.exp %184 : vector<8x128xf32>
    %cst_55 = arith.constant 1.000000e+00 : f32
    %186 = vector.broadcast %cst_55 : f32 to vector<8x128xf32>
    %187 = arith.addf %186, %185 : vector<8x128xf32>
    %188 = arith.divf %186, %187 : vector<8x128xf32>
    %189 = vector.extract_strided_slice %176 {offsets = [0, 256], sizes = [8, 128], strides = [1, 1]} : vector<8x512xf32> to vector<8x128xf32>
    %190 = math.tanh %189 : vector<8x128xf32>
    %191 = vector.extract_strided_slice %176 {offsets = [0, 384], sizes = [8, 128], strides = [1, 1]} : vector<8x512xf32> to vector<8x128xf32>
    %192 = arith.negf %191 : vector<8x128xf32>
    %193 = math.exp %192 : vector<8x128xf32>
    %cst_56 = arith.constant 1.000000e+00 : f32
    %194 = vector.broadcast %cst_56 : f32 to vector<8x128xf32>
    %195 = arith.addf %194, %193 : vector<8x128xf32>
    %196 = arith.divf %194, %195 : vector<8x128xf32>
    %197 = arith.mulf %188, %167 : vector<8x128xf32>
    %198 = arith.mulf %182, %190 : vector<8x128xf32>
    %199 = arith.addf %197, %198 : vector<8x128xf32>
    %200 = math.tanh %199 : vector<8x128xf32>
    %201 = arith.mulf %196, %200 : vector<8x128xf32>
    %c6_i32 = arith.constant 6 : i32
    %c8_i32_57 = arith.constant 8 : i32
    %202 = arith.muli %c6_i32, %c8_i32_57 : i32
    %203 = arith.index_cast %202 : i32 to index
    %c0_58 = arith.constant 0 : index
    %204 = vector.load %arg7[%203, %c0_58] : memref<64x512xf32, #tpu.memory_space<vmem>>, vector<8x512xf32>
    %205 = arith.truncf %201 : vector<8x128xf32> to vector<8x128xbf16>
    %c0_59 = arith.constant 0 : index
    %c0_60 = arith.constant 0 : index
    %206 = vector.load %arg2[%c0_59, %c0_60] : memref<128x512xbf16, #tpu.memory_space<vmem>>, vector<128x512xbf16>
    %cst_61 = arith.constant dense<0.000000e+00> : vector<8x512xf32>
    %207 = tpu.matmul %205, %206, %cst_61 {dimension_numbers = #tpu.dot_dimension_numbers<[1], [0], [0], [1], [0, 0, 1, 1], [], []>} : vector<8x128xbf16>, vector<128x512xbf16>, vector<8x512xf32> -> vector<8x512xf32>
    %208 = arith.addf %204, %207 : vector<8x512xf32>
    %209 = vector.extract_strided_slice %208 {offsets = [0, 0], sizes = [8, 128], strides = [1, 1]} : vector<8x512xf32> to vector<8x128xf32>
    %210 = arith.negf %209 : vector<8x128xf32>
    %211 = math.exp %210 : vector<8x128xf32>
    %cst_62 = arith.constant 1.000000e+00 : f32
    %212 = vector.broadcast %cst_62 : f32 to vector<8x128xf32>
    %213 = arith.addf %212, %211 : vector<8x128xf32>
    %214 = arith.divf %212, %213 : vector<8x128xf32>
    %215 = vector.extract_strided_slice %208 {offsets = [0, 128], sizes = [8, 128], strides = [1, 1]} : vector<8x512xf32> to vector<8x128xf32>
    %216 = arith.negf %215 : vector<8x128xf32>
    %217 = math.exp %216 : vector<8x128xf32>
    %cst_63 = arith.constant 1.000000e+00 : f32
    %218 = vector.broadcast %cst_63 : f32 to vector<8x128xf32>
    %219 = arith.addf %218, %217 : vector<8x128xf32>
    %220 = arith.divf %218, %219 : vector<8x128xf32>
    %221 = vector.extract_strided_slice %208 {offsets = [0, 256], sizes = [8, 128], strides = [1, 1]} : vector<8x512xf32> to vector<8x128xf32>
    %222 = math.tanh %221 : vector<8x128xf32>
    %223 = vector.extract_strided_slice %208 {offsets = [0, 384], sizes = [8, 128], strides = [1, 1]} : vector<8x512xf32> to vector<8x128xf32>
    %224 = arith.negf %223 : vector<8x128xf32>
    %225 = math.exp %224 : vector<8x128xf32>
    %cst_64 = arith.constant 1.000000e+00 : f32
    %226 = vector.broadcast %cst_64 : f32 to vector<8x128xf32>
    %227 = arith.addf %226, %225 : vector<8x128xf32>
    %228 = arith.divf %226, %227 : vector<8x128xf32>
    %229 = arith.mulf %220, %199 : vector<8x128xf32>
    %230 = arith.mulf %214, %222 : vector<8x128xf32>
    %231 = arith.addf %229, %230 : vector<8x128xf32>
    %232 = math.tanh %231 : vector<8x128xf32>
    %233 = arith.mulf %228, %232 : vector<8x128xf32>
    %c7_i32 = arith.constant 7 : i32
    %c8_i32_65 = arith.constant 8 : i32
    %234 = arith.muli %c7_i32, %c8_i32_65 : i32
    %235 = arith.index_cast %234 : i32 to index
    %c0_66 = arith.constant 0 : index
    %236 = vector.load %arg7[%235, %c0_66] : memref<64x512xf32, #tpu.memory_space<vmem>>, vector<8x512xf32>
    %237 = arith.truncf %233 : vector<8x128xf32> to vector<8x128xbf16>
    %c0_67 = arith.constant 0 : index
    %c0_68 = arith.constant 0 : index
    %238 = vector.load %arg2[%c0_67, %c0_68] : memref<128x512xbf16, #tpu.memory_space<vmem>>, vector<128x512xbf16>
    %cst_69 = arith.constant dense<0.000000e+00> : vector<8x512xf32>
    %239 = tpu.matmul %237, %238, %cst_69 {dimension_numbers = #tpu.dot_dimension_numbers<[1], [0], [0], [1], [0, 0, 1, 1], [], []>} : vector<8x128xbf16>, vector<128x512xbf16>, vector<8x512xf32> -> vector<8x512xf32>
    %240 = arith.addf %236, %239 : vector<8x512xf32>
    %241 = vector.extract_strided_slice %240 {offsets = [0, 0], sizes = [8, 128], strides = [1, 1]} : vector<8x512xf32> to vector<8x128xf32>
    %242 = arith.negf %241 : vector<8x128xf32>
    %243 = math.exp %242 : vector<8x128xf32>
    %cst_70 = arith.constant 1.000000e+00 : f32
    %244 = vector.broadcast %cst_70 : f32 to vector<8x128xf32>
    %245 = arith.addf %244, %243 : vector<8x128xf32>
    %246 = arith.divf %244, %245 : vector<8x128xf32>
    %247 = vector.extract_strided_slice %240 {offsets = [0, 128], sizes = [8, 128], strides = [1, 1]} : vector<8x512xf32> to vector<8x128xf32>
    %248 = arith.negf %247 : vector<8x128xf32>
    %249 = math.exp %248 : vector<8x128xf32>
    %cst_71 = arith.constant 1.000000e+00 : f32
    %250 = vector.broadcast %cst_71 : f32 to vector<8x128xf32>
    %251 = arith.addf %250, %249 : vector<8x128xf32>
    %252 = arith.divf %250, %251 : vector<8x128xf32>
    %253 = vector.extract_strided_slice %240 {offsets = [0, 256], sizes = [8, 128], strides = [1, 1]} : vector<8x512xf32> to vector<8x128xf32>
    %254 = math.tanh %253 : vector<8x128xf32>
    %255 = vector.extract_strided_slice %240 {offsets = [0, 384], sizes = [8, 128], strides = [1, 1]} : vector<8x512xf32> to vector<8x128xf32>
    %256 = arith.negf %255 : vector<8x128xf32>
    %257 = math.exp %256 : vector<8x128xf32>
    %cst_72 = arith.constant 1.000000e+00 : f32
    %258 = vector.broadcast %cst_72 : f32 to vector<8x128xf32>
    %259 = arith.addf %258, %257 : vector<8x128xf32>
    %260 = arith.divf %258, %259 : vector<8x128xf32>
    %261 = arith.mulf %252, %231 : vector<8x128xf32>
    %262 = arith.mulf %246, %254 : vector<8x128xf32>
    %263 = arith.addf %261, %262 : vector<8x128xf32>
    %264 = math.tanh %263 : vector<8x128xf32>
    %265 = arith.mulf %260, %264 : vector<8x128xf32>
    %c8_i32_73 = arith.constant 8 : i32
    %266 = arith.truncf %265 : vector<8x128xf32> to vector<8x128xbf16>
    %c0_74 = arith.constant 0 : index
    %c0_75 = arith.constant 0 : index
    %267 = vector.load %arg4[%c0_74, %c0_75] : memref<128x128xbf16, #tpu.memory_space<vmem>>, vector<128x128xbf16>
    %cst_76 = arith.constant dense<0.000000e+00> : vector<8x128xf32>
    %268 = tpu.matmul %266, %267, %cst_76 {dimension_numbers = #tpu.dot_dimension_numbers<[1], [0], [0], [1], [0, 0, 1, 1], [], []>} : vector<8x128xbf16>, vector<128x128xbf16>, vector<8x128xf32> -> vector<8x128xf32>
    %c0_77 = arith.constant 0 : index
    %c0_78 = arith.constant 0 : index
    %269 = vector.load %arg5[%c0_77, %c0_78] : memref<1x128xf32, #tpu.memory_space<vmem>>, vector<1x128xf32>
    %270 = vector.broadcast %269 : vector<1x128xf32> to vector<8x128xf32>
    %271 = arith.addf %268, %270 : vector<8x128xf32>
    %c0_79 = arith.constant 0 : index
    %c0_80 = arith.constant 0 : index
    %272 = vector.load %arg6[%c0_79, %c0_80] : memref<8x128xf32, #tpu.memory_space<vmem>>, vector<8x128xf32>
    tpu.vector_store %arg6[%c0_79, %c0_80], %271 {strides = array<i32>} : memref<8x128xf32, #tpu.memory_space<vmem>>, vector<8x128xf32>,
    return
  }
}

</mosaic_0001>

<llo_original>
// kernel: tpu_custom_call.1
$region0: #{tpu_custom_call.1}
  #allocation0 [shape = 'u32[]', space=smem, size = 0x4, offset = 0x4, fixed_abs, tag = 'smem constant byte address 0x4 - core index']
  #allocation1 [shape = 'u32[144,128]{1,0:T(1,128)}', space=vmem, size = 0x12000, scoped, tag = 'internal scratch']
  #allocation2 [shape = 'f32[64,512]{1,0:T(8,128)}', space=vmem, size = 0x20000, scoped, tag = 'scratch operand']
  %s0 = inlined_call_operand.vmem [shape: bf16[1,64,4], index: 0, kind: input, shape index: {}]
  %s1 = inlined_call_operand.vmem [shape: bf16[4,512], index: 1, kind: input, shape index: {}]
  %s2 = inlined_call_operand.hbm [shape: bf16[128,512], index: 2, kind: input, shape index: {}]
  %s3 = inlined_call_operand.vmem [shape: f32[1,512], index: 3, kind: input, shape index: {}]
  %s4 = inlined_call_operand.hbm [shape: bf16[128,128], index: 4, kind: input, shape index: {}]
  %s5 = inlined_call_operand.vmem [shape: f32[1,128], index: 5, kind: input, shape index: {}]
  %s6 = inlined_call_operand.hbm [shape: f32[8,128], index: 6, kind: output, shape index: {}]
  %s7 = sld [smem:[#allocation0]]
  $region42: #{tpu_custom_call.1} parent=0
    _
  %s9 = ssub.s32 1, %s7
  %s10 = scalar_select 0, %s9, %s7
  $region1: #{tpu_custom_call.1} parent=0
    #allocation3 [shape = 'u8[131072]{0}', space=vmem, size = 0x20000, scoped, tag = 'input window, operand 2, single buffered']
    #allocation4 [shape = 's32[1]{0}', space=sflag, size = 0x4, scoped, tag = 'scoped memory for tpu_custom_call.1']
    #allocation5 [shape = 's32[1]{0}', space=sflag, size = 0x4, scoped, tag = 'scoped memory for tpu_custom_call.1']
    #allocation6 [shape = 'u8[32768]{0}', space=vmem, size = 0x8000, scoped, tag = 'input window, operand 4, single buffered']
    #allocation7 [shape = 's32[1]{0}', space=sflag, size = 0x4, scoped, tag = 'scoped memory for tpu_custom_call.1']
    #allocation8 [shape = 'u8[4096]{0}', space=vmem, size = 0x1000, scoped, tag = 'output window, operand 0, single buffered']
    %11 = vsyncpa [#allocation4], 0
    %12 = vsyncpa [#allocation7], 0
    %13 = vsyncpa [#allocation5], 0
    // Predicated region
    $region2: #{tpu_custom_call.1} parent=1 // pred_check
      _
    $region3: #{tpu_custom_call.1} parent=1 // pred_check_branch
      %15 = sbr.rel (0) target = $region5
    $region4: #{tpu_custom_call.1} parent=1 // pred_region
      _
    $region5: #{tpu_custom_call.1} parent=1 // pred_fallthru
      _
    // Predicated region
    $region6: #{tpu_custom_call.1} parent=1 // pred_check
      _
    $region7: #{tpu_custom_call.1} parent=1 // pred_check_branch
      %17 = sbr.rel (0) target = $region9
    $region8: #{tpu_custom_call.1} parent=1 // pred_region
      _
    $region9: #{tpu_custom_call.1} parent=1 // pred_fallthru
      _
    // Predicated region
    $region10: #{tpu_custom_call.1} parent=1 // pred_check
      _
    $region11: #{tpu_custom_call.1} parent=1 // pred_check_branch
      %19 = sbr.rel (0) target = $region13
    $region12: #{tpu_custom_call.1} parent=1 // pred_region
      %s21 = ssub.s32 4096, 4096
      %22 = vsyncadd [#allocation4], %s21
      %s23 = sshll.u32 [#allocation3], 4
      %s24 = int_to_ptr.vmem [resolvable:$true] %s23
      %29 = dma.hbm_to_vmem [thread:$0]  %s2, 4096, %s24, [#allocation4], 256, 256, 16
    $region13: #{tpu_custom_call.1} parent=1 // pred_fallthru
      _
    // Predicated region
    $region14: #{tpu_custom_call.1} parent=1 // pred_check
      _
    $region15: #{tpu_custom_call.1} parent=1 // pred_check_branch
      %31 = sbr.rel (0) target = $region17
    $region16: #{tpu_custom_call.1} parent=1 // pred_region
      _
    $region17: #{tpu_custom_call.1} parent=1 // pred_fallthru
      _
    // Predicated region
    $region18: #{tpu_custom_call.1} parent=1 // pred_check
      _
    $region19: #{tpu_custom_call.1} parent=1 // pred_check_branch
      %33 = sbr.rel (0) target = $region21
    $region20: #{tpu_custom_call.1} parent=1 // pred_region
      %s35 = ssub.s32 1024, 1024
      %36 = vsyncadd [#allocation7], %s35
      %s37 = sshll.u32 [#allocation6], 4
      %s38 = int_to_ptr.vmem [resolvable:$true] %s37
      %43 = dma.hbm_to_vmem [thread:$0]  %s4, 1024, %s38, [#allocation7], 64, 64, 4
    $region21: #{tpu_custom_call.1} parent=1 // pred_fallthru
      _
    // Predicated region
    $region22: #{tpu_custom_call.1} parent=1 // pred_check
      _
    $region23: #{tpu_custom_call.1} parent=1 // pred_check_branch
      %45 = sbr.rel (0) target = $region25
    $region24: #{tpu_custom_call.1} parent=1 // pred_region
      _
    $region25: #{tpu_custom_call.1} parent=1 // pred_fallthru
      _
    // Predicated region
    $region26: #{tpu_custom_call.1} parent=1 // pred_check
      _
    $region27: #{tpu_custom_call.1} parent=1 // pred_check_branch
      %47 = sbr.rel (0) target = $region29
    $region28: #{tpu_custom_call.1} parent=1 // pred_region
      %48 = dma.done [#allocation4], 4096
    $region29: #{tpu_custom_call.1} parent=1 // pred_fallthru
      _
    // Predicated region
    $region30: #{tpu_custom_call.1} parent=1 // pred_check
      _
    $region31: #{tpu_custom_call.1} parent=1 // pred_check_branch
      %50 = sbr.rel (0) target = $region33
    $region32: #{tpu_custom_call.1} parent=1 // pred_region
      %51 = dma.done [#allocation7], 1024
    $region33: #{tpu_custom_call.1} parent=1 // pred_fallthru
      _
    %v53 = vld [vmem:[%s0] sm:$0xf]
    %v54 = vld [vmem:[%s0 + $0x4] sm:$0xf]
    %v55 = vld [vmem:[%s0 + $0x8] sm:$0xf]
    %v56 = vld [vmem:[%s0 + $0xc] sm:$0xf]
    %v57 = vld [vmem:[%s0 + $0x10] sm:$0xf]
    %v58 = vld [vmem:[%s0 + $0x14] sm:$0xf]
    %v59 = vld [vmem:[%s0 + $0x18] sm:$0xf]
    %v60 = vld [vmem:[%s0 + $0x1c] sm:$0xf]
    %v61 = vld [vmem:[%s1] sm:$0xff]
    %v62 = vld [vmem:[%s3] sm:$0xf]
    %v64 = vlaneseq
    %v65 = vshrl.u32 %v64, 7
    %v66 = vsub.s32 0, %v65
    %v67 = vrot.slane %v62, %v66
    %v68 = vlaneseq
    %v69 = vshrl.u32 %v68, 7
    %v70 = vsub.s32 1, %v69
    %v71 = vrot.slane %v62, %v70
    %v72 = vlaneseq
    %v73 = vshrl.u32 %v72, 7
    %v74 = vsub.s32 2, %v73
    %v75 = vrot.slane %v62, %v74
    %v76 = vlaneseq
    %v77 = vshrl.u32 %v76, 7
    %v78 = vsub.s32 3, %v77
    %v79 = vrot.slane %v62, %v78
    %v92 = vunpack.c.l.b16 %v53
    %v93 = vunpack.c.l.b16 %v54
    %v94 = vunpack.c.l.b16 %v55
    %v95 = vunpack.c.l.b16 %v56
    %v96 = vunpack.c.l.b16 %v57
    %v97 = vunpack.c.l.b16 %v58
    %v98 = vunpack.c.l.b16 %v59
    %v99 = vunpack.c.l.b16 %v60
    %v100 = vpack.c.b16 %v93, %v92
    %v101 = vpack.c.b16 %v95, %v94
    %v102 = vpack.c.b16 %v97, %v96
    %v103 = vpack.c.b16 %v99, %v98
    %v105 = vcombine.high %v61, %v61
    %v107 = vunpack.c.l.s4 1983009808
    %v108 = vunpack.c.0.s8 %v107
    %v109 = vlaneseq
    %v110 = vshrl.u32 %v109, 7
    %v111 = vsub.s32 %v108, %v110
    %v112 = vrot.slane %v61, %v111
    %v114 = vunpack.c.l.s4 1983009808
    %v115 = vunpack.c.0.s8 %v114
    %v116 = vlaneseq
    %v117 = vshrl.u32 %v116, 7
    %v118 = vsub.s32 %v115, %v117
    %v119 = vrot.slane %v105, %v118
    %v120 = vcombine.high %v112, %v112
    %v121 = vcombine.high %v119, %v119
    %vm122 = vcmask 31744
    %v124 = vsel %vm122, %v100, 0
    %v127 = vsel %vm122, %v101, 0
    %v130 = vsel %vm122, %v102, 0
    %v133 = vsel %vm122, %v103, 0
    %vm135 = vcmask 1041408
    %v137 = vsel %vm135, %v112, 0
    %v140 = vsel %vm135, %v120, 0
    %v143 = vsel %vm135, %v119, 0
    %v146 = vsel %vm135, %v121, 0
    %148 = vmatprep.subr.bf16.mxu0 %v140
    %149 = vmatpush1.bf16.msra.mxu0 %v137
    %150 = vmatprep.subr.bf16.mxu0 0
    %151 = vmatpush1.bf16.msra.mxu0 0
    %152 = vmatprep.subr.bf16.mxu0 0
    %153 = vmatpush1.bf16.msra.mxu0 0
    %154 = vmatprep.subr.bf16.mxu0 0
    %155 = vmatpush1.bf16.msra.mxu0 0
    %156 = vmatprep.subr.bf16.mxu0 0
    %157 = vmatpush1.bf16.msra.mxu0 0
    %158 = vmatprep.subr.bf16.mxu0 0
    %159 = vmatpush1.bf16.msra.mxu0 0
    %160 = vmatprep.subr.bf16.mxu0 0
    %161 = vmatpush1.bf16.msra.mxu0 0
    %162 = vmatprep.subr.bf16.mxu0 0
    %163 = vmatpush1.bf16.msra.mxu0 0
    %164 = vmatprep.subr.bf16.mxu0 0
    %165 = vmatpush1.bf16.msra.mxu0 0
    %166 = vmatprep.subr.bf16.mxu0 0
    %167 = vmatpush1.bf16.msra.mxu0 0
    %168 = vmatprep.subr.bf16.mxu0 0
    %169 = vmatpush1.bf16.msra.mxu0 0
    %170 = vmatprep.subr.bf16.mxu0 0
    %171 = vmatpush1.bf16.msra.mxu0 0
    %172 = vmatprep.subr.bf16.mxu0 0
    %173 = vmatpush1.bf16.msra.mxu0 0
    %174 = vmatprep.subr.bf16.mxu0 0
    %175 = vmatpush1.bf16.msra.mxu0 0
    %176 = vmatprep.subr.bf16.mxu0 0
    %177 = vmatpush1.bf16.msra.mxu0 0
    %178 = vmatprep.subr.bf16.mxu0 0
    %179 = vmatpush1.bf16.msra.mxu0 0
    %180 = vmatprep.mubr.bf16.mxu0 0
    %181 = vmatmul.mubr.bf16.gmra.mrb[0].mxu0 %v124
    %v182 = vpop.f32.mrb[0].mxu0
    %v183 = vadd.f32 %v67, %v182
    %v184 = vpop.f32.mrb[0].mxu0
    %v185 = vadd.f32 %v71, %v184
    %v186 = vpop.f32.mrb[0].mxu0
    %v187 = vadd.f32 %v67, %v186
    %v188 = vpop.f32.mrb[0].mxu0
    %v189 = vadd.f32 %v71, %v188
    %190 = vmatprep.mubr.bf16.mxu0 0
    %191 = vmatmul.mubr.bf16.gmra.mrb[0].mxu0 %v127
    %v192 = vpop.f32.mrb[0].mxu0
    %v193 = vadd.f32 %v67, %v192
    %v194 = vpop.f32.mrb[0].mxu0
    %v195 = vadd.f32 %v71, %v194
    %v196 = vpop.f32.mrb[0].mxu0
    %v197 = vadd.f32 %v67, %v196
    %v198 = vpop.f32.mrb[0].mxu0
    %v199 = vadd.f32 %v71, %v198
    %200 = vmatprep.mubr.bf16.mxu0 0
    %201 = vmatmul.mubr.bf16.gmra.mrb[0].mxu0 %v130
    %v202 = vpop.f32.mrb[0].mxu0
    %v203 = vadd.f32 %v67, %v202
    %v204 = vpop.f32.mrb[0].mxu0
    %v205 = vadd.f32 %v71, %v204
    %v206 = vpop.f32.mrb[0].mxu0
    %v207 = vadd.f32 %v67, %v206
    %v208 = vpop.f32.mrb[0].mxu0
    %v209 = vadd.f32 %v71, %v208
    %210 = vmatprep.mubr.bf16.mxu0 0
    %211 = vmatmul.mubr.bf16.gmra.mrb[0].mxu0 %v133
    %v212 = vpop.f32.mrb[0].mxu0
    %v213 = vadd.f32 %v67, %v212
    %v214 = vpop.f32.mrb[0].mxu0
    %v215 = vadd.f32 %v71, %v214
    %v216 = vpop.f32.mrb[0].mxu0
    %v217 = vadd.f32 %v67, %v216
    %v218 = vpop.f32.mrb[0].mxu0
    %v219 = vadd.f32 %v71, %v218
    %220 = vdwg.mxu0
    %221 = vmatprep.subr.bf16.mxu0 %v146
    %222 = vmatpush1.bf16.msra.mxu0 %v143
    %223 = vmatprep.subr.bf16.mxu0 0
    %224 = vmatpush1.bf16.msra.mxu0 0
    %225 = vmatprep.subr.bf16.mxu0 0
    %226 = vmatpush1.bf16.msra.mxu0 0
    %227 = vmatprep.subr.bf16.mxu0 0
    %228 = vmatpush1.bf16.msra.mxu0 0
    %229 = vmatprep.subr.bf16.mxu0 0
    %230 = vmatpush1.bf16.msra.mxu0 0
    %231 = vmatprep.subr.bf16.mxu0 0
    %232 = vmatpush1.bf16.msra.mxu0 0
    %233 = vmatprep.subr.bf16.mxu0 0
    %234 = vmatpush1.bf16.msra.mxu0 0
    %235 = vmatprep.subr.bf16.mxu0 0
    %236 = vmatpush1.bf16.msra.mxu0 0
    %237 = vmatprep.subr.bf16.mxu0 0
    %238 = vmatpush1.bf16.msra.mxu0 0
    %239 = vmatprep.subr.bf16.mxu0 0
    %240 = vmatpush1.bf16.msra.mxu0 0
    %241 = vmatprep.subr.bf16.mxu0 0
    %242 = vmatpush1.bf16.msra.mxu0 0
    %243 = vmatprep.subr.bf16.mxu0 0
    %244 = vmatpush1.bf16.msra.mxu0 0
    %245 = vmatprep.subr.bf16.mxu0 0
    %246 = vmatpush1.bf16.msra.mxu0 0
    %247 = vmatprep.subr.bf16.mxu0 0
    %248 = vmatpush1.bf16.msra.mxu0 0
    %249 = vmatprep.subr.bf16.mxu0 0
    %250 = vmatpush1.bf16.msra.mxu0 0
    %251 = vmatprep.subr.bf16.mxu0 0
    %252 = vmatpush1.bf16.msra.mxu0 0
    %253 = vmatprep.mubr.bf16.mxu0 0
    %254 = vmatmul.mubr.bf16.gmra.mrb[0].mxu0 %v124
    %v255 = vpop.f32.mrb[0].mxu0
    %v256 = vadd.f32 %v75, %v255
    %v257 = vpop.f32.mrb[0].mxu0
    %v258 = vadd.f32 %v79, %v257
    %v259 = vpop.f32.mrb[0].mxu0
    %v260 = vadd.f32 %v75, %v259
    %v261 = vpop.f32.mrb[0].mxu0
    %v262 = vadd.f32 %v79, %v261
    %263 = vmatprep.mubr.bf16.mxu0 0
    %264 = vmatmul.mubr.bf16.gmra.mrb[0].mxu0 %v127
    %v265 = vpop.f32.mrb[0].mxu0
    %v266 = vadd.f32 %v75, %v265
    %v267 = vpop.f32.mrb[0].mxu0
    %v268 = vadd.f32 %v79, %v267
    %v269 = vpop.f32.mrb[0].mxu0
    %v270 = vadd.f32 %v75, %v269
    %v271 = vpop.f32.mrb[0].mxu0
    %v272 = vadd.f32 %v79, %v271
    %273 = vmatprep.mubr.bf16.mxu0 0
    %274 = vmatmul.mubr.bf16.gmra.mrb[0].mxu0 %v130
    %v275 = vpop.f32.mrb[0].mxu0
    %v276 = vadd.f32 %v75, %v275
    %v277 = vpop.f32.mrb[0].mxu0
    %v278 = vadd.f32 %v79, %v277
    %v279 = vpop.f32.mrb[0].mxu0
    %v280 = vadd.f32 %v75, %v279
    %v281 = vpop.f32.mrb[0].mxu0
    %v282 = vadd.f32 %v79, %v281
    %283 = vmatprep.mubr.bf16.mxu0 0
    %284 = vmatmul.mubr.bf16.gmra.mrb[0].mxu0 %v133
    %v285 = vpop.f32.mrb[0].mxu0
    %v286 = vadd.f32 %v75, %v285
    %v287 = vpop.f32.mrb[0].mxu0
    %v288 = vadd.f32 %v79, %v287
    %v289 = vpop.f32.mrb[0].mxu0
    %v290 = vadd.f32 %v75, %v289
    %v291 = vpop.f32.mrb[0].mxu0
    %v292 = vadd.f32 %v79, %v291
    %293 = vdwg.mxu0
    %294 = vst [vmem:[#allocation2] sm:$0xff] %v183
    %295 = vst [vmem:[#allocation2 + $0x8] sm:$0xff] %v185
    %296 = vst [vmem:[#allocation2 + $0x10] sm:$0xff] %v256
    %297 = vst [vmem:[#allocation2 + $0x18] sm:$0xff] %v258
    %298 = vst [vmem:[#allocation2 + $0x20] sm:$0xff] %v187
    %299 = vst [vmem:[#allocation2 + $0x28] sm:$0xff] %v189
    %300 = vst [vmem:[#allocation2 + $0x30] sm:$0xff] %v260
    %301 = vst [vmem:[#allocation2 + $0x38] sm:$0xff] %v262
    %302 = vst [vmem:[#allocation2 + $0x40] sm:$0xff] %v193
    %303 = vst [vmem:[#allocation2 + $0x48] sm:$0xff] %v195
    %304 = vst [vmem:[#allocation2 + $0x50] sm:$0xff] %v266
    %305 = vst [vmem:[#allocation2 + $0x58] sm:$0xff] %v268
    %306 = vst [vmem:[#allocation2 + $0x60] sm:$0xff] %v197
    %307 = vst [vmem:[#allocation2 + $0x68] sm:$0xff] %v199
    %308 = vst [vmem:[#allocation2 + $0x70] sm:$0xff] %v270
    %309 = vst [vmem:[#allocation2 + $0x78] sm:$0xff] %v272
    %310 = vst [vmem:[#allocation2 + $0x80] sm:$0xff] %v203
    %311 = vst [vmem:[#allocation2 + $0x88] sm:$0xff] %v205
    %312 = vst [vmem:[#allocation2 + $0x90] sm:$0xff] %v276
    %313 = vst [vmem:[#allocation2 + $0x98] sm:$0xff] %v278
    %314 = vst [vmem:[#allocation2 + $0xa0] sm:$0xff] %v207
    %315 = vst [vmem:[#allocation2 + $0xa8] sm:$0xff] %v209
    %316 = vst [vmem:[#allocation2 + $0xb0] sm:$0xff] %v280
    %317 = vst [vmem:[#allocation2 + $0xb8] sm:$0xff] %v282
    %318 = vst [vmem:[#allocation2 + $0xc0] sm:$0xff] %v213
    %319 = vst [vmem:[#allocation2 + $0xc8] sm:$0xff] %v215
    %320 = vst [vmem:[#allocation2 + $0xd0] sm:$0xff] %v286
    %321 = vst [vmem:[#allocation2 + $0xd8] sm:$0xff] %v288
    %322 = vst [vmem:[#allocation2 + $0xe0] sm:$0xff] %v217
    %323 = vst [vmem:[#allocation2 + $0xe8] sm:$0xff] %v219
    %324 = vst [vmem:[#allocation2 + $0xf0] sm:$0xff] %v290
    %325 = vst [vmem:[#allocation2 + $0xf8] sm:$0xff] %v292
    %v326 = vld [vmem:[#allocation2] sm:$0xff]
    %v327 = vld [vmem:[#allocation2 + $0x8] sm:$0xff]
    %v328 = vld [vmem:[#allocation2 + $0x10] sm:$0xff]
    %v329 = vld [vmem:[#allocation2 + $0x18] sm:$0xff]
    %v330 = vld [vmem:[#allocation3] sm:$0xff]
    %v331 = vld [vmem:[#allocation3 + $0x8] sm:$0xff]
    %v332 = vld [vmem:[#allocation3 + $0x10] sm:$0xff]
    %v333 = vld [vmem:[#allocation3 + $0x18] sm:$0xff]
    %v334 = vld [vmem:[#allocation3 + $0x20] sm:$0xff]
    %v335 = vld [vmem:[#allocation3 + $0x28] sm:$0xff]
    %v336 = vld [vmem:[#allocation3 + $0x30] sm:$0xff]
    %v337 = vld [vmem:[#allocation3 + $0x38] sm:$0xff]
    %v338 = vld [vmem:[#allocation3 + $0x40] sm:$0xff]
    %v339 = vld [vmem:[#allocation3 + $0x48] sm:$0xff]
    %v340 = vld [vmem:[#allocation3 + $0x50] sm:$0xff]
    %v341 = vld [vmem:[#allocation3 + $0x58] sm:$0xff]
    %v342 = vld [vmem:[#allocation3 + $0x60] sm:$0xff]
    %v343 = vld [vmem:[#allocation3 + $0x68] sm:$0xff]
    %v344 = vld [vmem:[#allocation3 + $0x70] sm:$0xff]
    %v345 = vld [vmem:[#allocation3 + $0x78] sm:$0xff]
    %v346 = vld [vmem:[#allocation3 + $0x80] sm:$0xff]
    %v347 = vld [vmem:[#allocation3 + $0x88] sm:$0xff]
    %v348 = vld [vmem:[#allocation3 + $0x90] sm:$0xff]
    %v349 = vld [vmem:[#allocation3 + $0x98] sm:$0xff]
    %v350 = vld [vmem:[#allocation3 + $0xa0] sm:$0xff]
    %v351 = vld [vmem:[#allocation3 + $0xa8] sm:$0xff]
    %v352 = vld [vmem:[#allocation3 + $0xb0] sm:$0xff]
    %v353 = vld [vmem:[#allocation3 + $0xb8] sm:$0xff]
    %v354 = vld [vmem:[#allocation3 + $0xc0] sm:$0xff]
    %v355 = vld [vmem:[#allocation3 + $0xc8] sm:$0xff]
    %v356 = vld [vmem:[#allocation3 + $0xd0] sm:$0xff]
    %v357 = vld [vmem:[#allocation3 + $0xd8] sm:$0xff]
    %v358 = vld [vmem:[#allocation3 + $0xe0] sm:$0xff]
    %v359 = vld [vmem:[#allocation3 + $0xe8] sm:$0xff]
    %v360 = vld [vmem:[#allocation3 + $0xf0] sm:$0xff]
    %v361 = vld [vmem:[#allocation3 + $0xf8] sm:$0xff]
    %v394 = vunpack.c.l.b16 %v330
    %v395 = vunpack.c.h.b16 %v330
    %v396 = vunpack.c.l.b16 %v331
    %v397 = vunpack.c.h.b16 %v331
    %v398 = vunpack.c.l.b16 %v332
    %v399 = vunpack.c.h.b16 %v332
    %v400 = vunpack.c.l.b16 %v333
    %v401 = vunpack.c.h.b16 %v333
    %v402 = vunpack.c.l.b16 %v334
    %v403 = vunpack.c.h.b16 %v334
    %v404 = vunpack.c.l.b16 %v335
    %v405 = vunpack.c.h.b16 %v335
    %v406 = vunpack.c.l.b16 %v336
    %v407 = vunpack.c.h.b16 %v336
    %v408 = vunpack.c.l.b16 %v337
    %v409 = vunpack.c.h.b16 %v337
    %v410 = vunpack.c.l.b16 %v338
    %v411 = vunpack.c.h.b16 %v338
    %v412 = vunpack.c.l.b16 %v339
    %v413 = vunpack.c.h.b16 %v339
    %v414 = vunpack.c.l.b16 %v340
    %v415 = vunpack.c.h.b16 %v340
    %v416 = vunpack.c.l.b16 %v341
    %v417 = vunpack.c.h.b16 %v341
    %v418 = vunpack.c.l.b16 %v342
    %v419 = vunpack.c.h.b16 %v342
    %v420 = vunpack.c.l.b16 %v343
    %v421 = vunpack.c.h.b16 %v343
    %v422 = vunpack.c.l.b16 %v344
    %v423 = vunpack.c.h.b16 %v344
    %v424 = vunpack.c.l.b16 %v345
    %v425 = vunpack.c.h.b16 %v345
    %v426 = vunpack.c.l.b16 %v346
    %v427 = vunpack.c.h.b16 %v346
    %v428 = vunpack.c.l.b16 %v347
    %v429 = vunpack.c.h.b16 %v347
    %v430 = vunpack.c.l.b16 %v348
    %v431 = vunpack.c.h.b16 %v348
    %v432 = vunpack.c.l.b16 %v349
    %v433 = vunpack.c.h.b16 %v349
    %v434 = vunpack.c.l.b16 %v350
    %v435 = vunpack.c.h.b16 %v350
    %v436 = vunpack.c.l.b16 %v351
    %v437 = vunpack.c.h.b16 %v351
    %v438 = vunpack.c.l.b16 %v352
    %v439 = vunpack.c.h.b16 %v352
    %v440 = vunpack.c.l.b16 %v353
    %v441 = vunpack.c.h.b16 %v353
    %v442 = vunpack.c.l.b16 %v354
    %v443 = vunpack.c.h.b16 %v354
    %v444 = vunpack.c.l.b16 %v355
    %v445 = vunpack.c.h.b16 %v355
    %v446 = vunpack.c.l.b16 %v356
    %v447 = vunpack.c.h.b16 %v356
    %v448 = vunpack.c.l.b16 %v357
    %v449 = vunpack.c.h.b16 %v357
    %v450 = vunpack.c.l.b16 %v358
    %v451 = vunpack.c.h.b16 %v358
    %v452 = vunpack.c.l.b16 %v359
    %v453 = vunpack.c.h.b16 %v359
    %v454 = vunpack.c.l.b16 %v360
    %v455 = vunpack.c.h.b16 %v360
    %v456 = vunpack.c.l.b16 %v361
    %v457 = vunpack.c.h.b16 %v361
    %v458 = vpack.c.b16 %v398, %v394
    %v459 = vpack.c.b16 %v399, %v395
    %v460 = vpack.c.b16 %v400, %v396
    %v461 = vpack.c.b16 %v401, %v397
    %v462 = vpack.c.b16 %v406, %v402
    %v463 = vpack.c.b16 %v407, %v403
    %v464 = vpack.c.b16 %v408, %v404
    %v465 = vpack.c.b16 %v409, %v405
    %v466 = vpack.c.b16 %v414, %v410
    %v467 = vpack.c.b16 %v415, %v411
    %v468 = vpack.c.b16 %v416, %v412
    %v469 = vpack.c.b16 %v417, %v413
    %v470 = vpack.c.b16 %v422, %v418
    %v471 = vpack.c.b16 %v423, %v419
    %v472 = vpack.c.b16 %v424, %v420
    %v473 = vpack.c.b16 %v425, %v421
    %v474 = vpack.c.b16 %v430, %v426
    %v475 = vpack.c.b16 %v431, %v427
    %v476 = vpack.c.b16 %v432, %v428
    %v477 = vpack.c.b16 %v433, %v429
    %v478 = vpack.c.b16 %v438, %v434
    %v479 = vpack.c.b16 %v439, %v435
    %v480 = vpack.c.b16 %v440, %v436
    %v481 = vpack.c.b16 %v441, %v437
    %v482 = vpack.c.b16 %v446, %v442
    %v483 = vpack.c.b16 %v447, %v443
    %v484 = vpack.c.b16 %v448, %v444
    %v485 = vpack.c.b16 %v449, %v445
    %v486 = vpack.c.b16 %v454, %v450
    %v487 = vpack.c.b16 %v455, %v451
    %v488 = vpack.c.b16 %v456, %v452
    %v489 = vpack.c.b16 %v457, %v453
    %522 = vmatprep.subr.bf16.mxu0 %v459
    %523 = vmatpush1.bf16.msra.mxu0 %v458
    %524 = vmatprep.subr.bf16.mxu0 %v463
    %525 = vmatpush1.bf16.msra.mxu0 %v462
    %526 = vmatprep.subr.bf16.mxu0 %v467
    %527 = vmatpush1.bf16.msra.mxu0 %v466
    %528 = vmatprep.subr.bf16.mxu0 %v471
    %529 = vmatpush1.bf16.msra.mxu0 %v470
    %530 = vmatprep.subr.bf16.mxu0 %v475
    %531 = vmatpush1.bf16.msra.mxu0 %v474
    %532 = vmatprep.subr.bf16.mxu0 %v479
    %533 = vmatpush1.bf16.msra.mxu0 %v478
    %534 = vmatprep.subr.bf16.mxu0 %v483
    %535 = vmatpush1.bf16.msra.mxu0 %v482
    %536 = vmatprep.subr.bf16.mxu0 %v487
    %537 = vmatpush1.bf16.msra.mxu0 %v486
    %538 = vmatprep.subr.bf16.mxu0 0
    %539 = vmatpush1.bf16.msra.mxu0 0
    %540 = vmatprep.subr.bf16.mxu0 0
    %541 = vmatpush1.bf16.msra.mxu0 0
    %542 = vmatprep.subr.bf16.mxu0 0
    %543 = vmatpush1.bf16.msra.mxu0 0
    %544 = vmatprep.subr.bf16.mxu0 0
    %545 = vmatpush1.bf16.msra.mxu0 0
    %546 = vmatprep.subr.bf16.mxu0 0
    %547 = vmatpush1.bf16.msra.mxu0 0
    %548 = vmatprep.subr.bf16.mxu0 0
    %549 = vmatpush1.bf16.msra.mxu0 0
    %550 = vmatprep.subr.bf16.mxu0 0
    %551 = vmatpush1.bf16.msra.mxu0 0
    %552 = vmatprep.subr.bf16.mxu0 0
    %553 = vmatpush1.bf16.msra.mxu0 0
    %554 = vmatprep.mubr.bf16.mxu0 0
    %555 = vmatmul.mubr.bf16.gmra.mrb[0].mxu0 0
    %v556 = vpop.f32.mrb[0].mxu0
    %v557 = vadd.f32 0.0, %v556
    %v558 = vpop.f32.mrb[0].mxu0
    %v559 = vadd.f32 0.0, %v558
    %v560 = vpop.f32.mrb[0].mxu0
    %v561 = vpop.f32.mrb[0].mxu0
    %562 = vdwg.mxu0
    %563 = vmatprep.subr.bf16.mxu0 %v461
    %564 = vmatpush1.bf16.msra.mxu0 %v460
    %565 = vmatprep.subr.bf16.mxu0 %v465
    %566 = vmatpush1.bf16.msra.mxu0 %v464
    %567 = vmatprep.subr.bf16.mxu0 %v469
    %568 = vmatpush1.bf16.msra.mxu0 %v468
    %569 = vmatprep.subr.bf16.mxu0 %v473
    %570 = vmatpush1.bf16.msra.mxu0 %v472
    %571 = vmatprep.subr.bf16.mxu0 %v477
    %572 = vmatpush1.bf16.msra.mxu0 %v476
    %573 = vmatprep.subr.bf16.mxu0 %v481
    %574 = vmatpush1.bf16.msra.mxu0 %v480
    %575 = vmatprep.subr.bf16.mxu0 %v485
    %576 = vmatpush1.bf16.msra.mxu0 %v484
    %577 = vmatprep.subr.bf16.mxu0 %v489
    %578 = vmatpush1.bf16.msra.mxu0 %v488
    %579 = vmatprep.subr.bf16.mxu0 0
    %580 = vmatpush1.bf16.msra.mxu0 0
    %581 = vmatprep.subr.bf16.mxu0 0
    %582 = vmatpush1.bf16.msra.mxu0 0
    %583 = vmatprep.subr.bf16.mxu0 0
    %584 = vmatpush1.bf16.msra.mxu0 0
    %585 = vmatprep.subr.bf16.mxu0 0
    %586 = vmatpush1.bf16.msra.mxu0 0
    %587 = vmatprep.subr.bf16.mxu0 0
    %588 = vmatpush1.bf16.msra.mxu0 0
    %589 = vmatprep.subr.bf16.mxu0 0
    %590 = vmatpush1.bf16.msra.mxu0 0
    %591 = vmatprep.subr.bf16.mxu0 0
    %592 = vmatpush1.bf16.msra.mxu0 0
    %593 = vmatprep.subr.bf16.mxu0 0
    %594 = vmatpush1.bf16.msra.mxu0 0
    %595 = vmatprep.mubr.bf16.mxu0 0
    %596 = vmatmul.mubr.bf16.gmra.mrb[0].mxu0 0
    %v597 = vpop.f32.mrb[0].mxu0
    %v598 = vadd.f32 0.0, %v597
    %v599 = vpop.f32.mrb[0].mxu0
    %v600 = vadd.f32 0.0, %v599
    %v601 = vpop.f32.mrb[0].mxu0
    %v602 = vpop.f32.mrb[0].mxu0
    %603 = vdwg.mxu0
    %v604 = vadd.f32 %v326, %v557
    %v605 = vadd.f32 %v327, %v559
    %v606 = vadd.f32 %v328, %v598
    %v607 = vadd.f32 %v329, %v600
    %v608 = vxor.u32 %v604, 2147483648
    %v609 = vmul.f32 %v608, 1.442695
    %v610 = vpow.pop %v609
    %v611 = vadd.f32 %v610, 1.0
    %v612 = vrcp.pop %v611
    %v613 = vmul.f32 1.0, %v612
    %v614 = vxor.u32 %v605, 2147483648
    %v615 = vmul.f32 %v614, 1.442695
    %v616 = vpow.pop %v615
    %v617 = vadd.f32 %v616, 1.0
    %v618 = vrcp.pop %v617
    %v619 = vmul.f32 1.0, %v618
    %v620 = vtanh.pop %v606
    %v621 = vxor.u32 %v607, 2147483648
    %v622 = vmul.f32 %v621, 1.442695
    %v623 = vpow.pop %v622
    %v624 = vadd.f32 %v623, 1.0
    %v625 = vrcp.pop %v624
    %v626 = vmul.f32 1.0, %v625
    %v627 = vmul.f32 %v619, 0.0
    %v628 = vmul.f32 %v613, %v620
    %v629 = vadd.f32 %v627, %v628
    %v630 = vtanh.pop %v629
    %v631 = vmul.f32 %v626, %v630
    %v632 = vld [vmem:[#allocation2 + $0x20] sm:$0xff]
    %v633 = vld [vmem:[#allocation2 + $0x28] sm:$0xff]
    %v634 = vld [vmem:[#allocation2 + $0x30] sm:$0xff]
    %v635 = vld [vmem:[#allocation2 + $0x38] sm:$0xff]
    %v636 = vpack.c.bf16 %v631, %v631
    %637 = vmatprep.subr.bf16.mxu0 %v459
    %638 = vmatpush1.bf16.msra.mxu0 %v458
    %639 = vmatprep.subr.bf16.mxu0 %v463
    %640 = vmatpush1.bf16.msra.mxu0 %v462
    %641 = vmatprep.subr.bf16.mxu0 %v467
    %642 = vmatpush1.bf16.msra.mxu0 %v466
    %643 = vmatprep.subr.bf16.mxu0 %v471
    %644 = vmatpush1.bf16.msra.mxu0 %v470
    %645 = vmatprep.subr.bf16.mxu0 %v475
    %646 = vmatpush1.bf16.msra.mxu0 %v474
    %647 = vmatprep.subr.bf16.mxu0 %v479
    %648 = vmatpush1.bf16.msra.mxu0 %v478
    %649 = vmatprep.subr.bf16.mxu0 %v483
    %650 = vmatpush1.bf16.msra.mxu0 %v482
    %651 = vmatprep.subr.bf16.mxu0 %v487
    %652 = vmatpush1.bf16.msra.mxu0 %v486
    %653 = vmatprep.subr.bf16.mxu0 0
    %654 = vmatpush1.bf16.msra.mxu0 0
    %655 = vmatprep.subr.bf16.mxu0 0
    %656 = vmatpush1.bf16.msra.mxu0 0
    %657 = vmatprep.subr.bf16.mxu0 0
    %658 = vmatpush1.bf16.msra.mxu0 0
    %659 = vmatprep.subr.bf16.mxu0 0
    %660 = vmatpush1.bf16.msra.mxu0 0
    %661 = vmatprep.subr.bf16.mxu0 0
    %662 = vmatpush1.bf16.msra.mxu0 0
    %663 = vmatprep.subr.bf16.mxu0 0
    %664 = vmatpush1.bf16.msra.mxu0 0
    %665 = vmatprep.subr.bf16.mxu0 0
    %666 = vmatpush1.bf16.msra.mxu0 0
    %667 = vmatprep.subr.bf16.mxu0 0
    %668 = vmatpush1.bf16.msra.mxu0 0
    %669 = vmatprep.mubr.bf16.mxu0 0
    %670 = vmatmul.mubr.bf16.gmra.mrb[0].mxu0 %v636
    %v671 = vpop.f32.mrb[0].mxu0
    %v672 = vadd.f32 0.0, %v671
    %v673 = vpop.f32.mrb[0].mxu0
    %v674 = vadd.f32 0.0, %v673
    %v675 = vpop.f32.mrb[0].mxu0
    %v676 = vpop.f32.mrb[0].mxu0
    %677 = vdwg.mxu0
    %678 = vmatprep.subr.bf16.mxu0 %v461
    %679 = vmatpush1.bf16.msra.mxu0 %v460
    %680 = vmatprep.subr.bf16.mxu0 %v465
    %681 = vmatpush1.bf16.msra.mxu0 %v464
    %682 = vmatprep.subr.bf16.mxu0 %v469
    %683 = vmatpush1.bf16.msra.mxu0 %v468
    %684 = vmatprep.subr.bf16.mxu0 %v473
    %685 = vmatpush1.bf16.msra.mxu0 %v472
    %686 = vmatprep.subr.bf16.mxu0 %v477
    %687 = vmatpush1.bf16.msra.mxu0 %v476
    %688 = vmatprep.subr.bf16.mxu0 %v481
    %689 = vmatpush1.bf16.msra.mxu0 %v480
    %690 = vmatprep.subr.bf16.mxu0 %v485
    %691 = vmatpush1.bf16.msra.mxu0 %v484
    %692 = vmatprep.subr.bf16.mxu0 %v489
    %693 = vmatpush1.bf16.msra.mxu0 %v488
    %694 = vmatprep.subr.bf16.mxu0 0
    %695 = vmatpush1.bf16.msra.mxu0 0
    %696 = vmatprep.subr.bf16.mxu0 0
    %697 = vmatpush1.bf16.msra.mxu0 0
    %698 = vmatprep.subr.bf16.mxu0 0
    %699 = vmatpush1.bf16.msra.mxu0 0
    %700 = vmatprep.subr.bf16.mxu0 0
    %701 = vmatpush1.bf16.msra.mxu0 0
    %702 = vmatprep.subr.bf16.mxu0 0
    %703 = vmatpush1.bf16.msra.mxu0 0
    %704 = vmatprep.subr.bf16.mxu0 0
    %705 = vmatpush1.bf16.msra.mxu0 0
    %706 = vmatprep.subr.bf16.mxu0 0
    %707 = vmatpush1.bf16.msra.mxu0 0
    %708 = vmatprep.subr.bf16.mxu0 0
    %709 = vmatpush1.bf16.msra.mxu0 0
    %710 = vmatprep.mubr.bf16.mxu0 0
    %711 = vmatmul.mubr.bf16.gmra.mrb[0].mxu0 %v636
    %v712 = vpop.f32.mrb[0].mxu0
    %v713 = vadd.f32 0.0, %v712
    %v714 = vpop.f32.mrb[0].mxu0
    %v715 = vadd.f32 0.0, %v714
    %v716 = vpop.f32.mrb[0].mxu0
    %v717 = vpop.f32.mrb[0].mxu0
    %718 = vdwg.mxu0
    %v719 = vadd.f32 %v632, %v672
    %v720 = vadd.f32 %v633, %v674
    %v721 = vadd.f32 %v634, %v713
    %v722 = vadd.f32 %v635, %v715
    %v723 = vxor.u32 %v719, 2147483648
    %v724 = vmul.f32 %v723, 1.442695
    %v725 = vpow.pop %v724
    %v726 = vadd.f32 %v725, 1.0
    %v727 = vrcp.pop %v726
    %v728 = vmul.f32 1.0, %v727
    %v729 = vxor.u32 %v720, 2147483648
    %v730 = vmul.f32 %v729, 1.442695
    %v731 = vpow.pop %v730
    %v732 = vadd.f32 %v731, 1.0
    %v733 = vrcp.pop %v732
    %v734 = vmul.f32 1.0, %v733
    %v735 = vtanh.pop %v721
    %v736 = vxor.u32 %v722, 2147483648
    %v737 = vmul.f32 %v736, 1.442695
    %v738 = vpow.pop %v737
    %v739 = vadd.f32 %v738, 1.0
    %v740 = vrcp.pop %v739
    %v741 = vmul.f32 1.0, %v740
    %v742 = vmul.f32 %v734, %v629
    %v743 = vmul.f32 %v728, %v735
    %v744 = vadd.f32 %v742, %v743
    %v745 = vtanh.pop %v744
    %v746 = vmul.f32 %v741, %v745
    %v747 = vld [vmem:[#allocation2 + $0x40] sm:$0xff]
    %v748 = vld [vmem:[#allocation2 + $0x48] sm:$0xff]
    %v749 = vld [vmem:[#allocation2 + $0x50] sm:$0xff]
    %v750 = vld [vmem:[#allocation2 + $0x58] sm:$0xff]
    %v751 = vpack.c.bf16 %v746, %v746
    %752 = vmatprep.subr.bf16.mxu0 %v459
    %753 = vmatpush1.bf16.msra.mxu0 %v458
    %754 = vmatprep.subr.bf16.mxu0 %v463
    %755 = vmatpush1.bf16.msra.mxu0 %v462
    %756 = vmatprep.subr.bf16.mxu0 %v467
    %757 = vmatpush1.bf16.msra.mxu0 %v466
    %758 = vmatprep.subr.bf16.mxu0 %v471
    %759 = vmatpush1.bf16.msra.mxu0 %v470
    %760 = vmatprep.subr.bf16.mxu0 %v475
    %761 = vmatpush1.bf16.msra.mxu0 %v474
    %762 = vmatprep.subr.bf16.mxu0 %v479
    %763 = vmatpush1.bf16.msra.mxu0 %v478
    %764 = vmatprep.subr.bf16.mxu0 %v483
    %765 = vmatpush1.bf16.msra.mxu0 %v482
    %766 = vmatprep.subr.bf16.mxu0 %v487
    %767 = vmatpush1.bf16.msra.mxu0 %v486
    %768 = vmatprep.subr.bf16.mxu0 0
    %769 = vmatpush1.bf16.msra.mxu0 0
    %770 = vmatprep.subr.bf16.mxu0 0
    %771 = vmatpush1.bf16.msra.mxu0 0
    %772 = vmatprep.subr.bf16.mxu0 0
    %773 = vmatpush1.bf16.msra.mxu0 0
    %774 = vmatprep.subr.bf16.mxu0 0
    %775 = vmatpush1.bf16.msra.mxu0 0
    %776 = vmatprep.subr.bf16.mxu0 0
    %777 = vmatpush1.bf16.msra.mxu0 0
    %778 = vmatprep.subr.bf16.mxu0 0
    %779 = vmatpush1.bf16.msra.mxu0 0
    %780 = vmatprep.subr.bf16.mxu0 0
    %781 = vmatpush1.bf16.msra.mxu0 0
    %782 = vmatprep.subr.bf16.mxu0 0
    %783 = vmatpush1.bf16.msra.mxu0 0
    %784 = vmatprep.mubr.bf16.mxu0 0
    %785 = vmatmul.mubr.bf16.gmra.mrb[0].mxu0 %v751
    %v786 = vpop.f32.mrb[0].mxu0
    %v787 = vadd.f32 0.0, %v786
    %v788 = vpop.f32.mrb[0].mxu0
    %v789 = vadd.f32 0.0, %v788
    %v790 = vpop.f32.mrb[0].mxu0
    %v791 = vpop.f32.mrb[0].mxu0
    %792 = vdwg.mxu0
    %793 = vmatprep.subr.bf16.mxu0 %v461
    %794 = vmatpush1.bf16.msra.mxu0 %v460
    %795 = vmatprep.subr.bf16.mxu0 %v465
    %796 = vmatpush1.bf16.msra.mxu0 %v464
    %797 = vmatprep.subr.bf16.mxu0 %v469
    %798 = vmatpush1.bf16.msra.mxu0 %v468
    %799 = vmatprep.subr.bf16.mxu0 %v473
    %800 = vmatpush1.bf16.msra.mxu0 %v472
    %801 = vmatprep.subr.bf16.mxu0 %v477
    %802 = vmatpush1.bf16.msra.mxu0 %v476
    %803 = vmatprep.subr.bf16.mxu0 %v481
    %804 = vmatpush1.bf16.msra.mxu0 %v480
    %805 = vmatprep.subr.bf16.mxu0 %v485
    %806 = vmatpush1.bf16.msra.mxu0 %v484
    %807 = vmatprep.subr.bf16.mxu0 %v489
    %808 = vmatpush1.bf16.msra.mxu0 %v488
    %809 = vmatprep.subr.bf16.mxu0 0
    %810 = vmatpush1.bf16.msra.mxu0 0
    %811 = vmatprep.subr.bf16.mxu0 0
    %812 = vmatpush1.bf16.msra.mxu0 0
    %813 = vmatprep.subr.bf16.mxu0 0
    %814 = vmatpush1.bf16.msra.mxu0 0
    %815 = vmatprep.subr.bf16.mxu0 0
    %816 = vmatpush1.bf16.msra.mxu0 0
    %817 = vmatprep.subr.bf16.mxu0 0
    %818 = vmatpush1.bf16.msra.mxu0 0
    %819 = vmatprep.subr.bf16.mxu0 0
    %820 = vmatpush1.bf16.msra.mxu0 0
    %821 = vmatprep.subr.bf16.mxu0 0
    %822 = vmatpush1.bf16.msra.mxu0 0
    %823 = vmatprep.subr.bf16.mxu0 0
    %824 = vmatpush1.bf16.msra.mxu0 0
    %825 = vmatprep.mubr.bf16.mxu0 0
    %826 = vmatmul.mubr.bf16.gmra.mrb[0].mxu0 %v751
    %v827 = vpop.f32.mrb[0].mxu0
    %v828 = vadd.f32 0.0, %v827
    %v829 = vpop.f32.mrb[0].mxu0
    %v830 = vadd.f32 0.0, %v829
    %v831 = vpop.f32.mrb[0].mxu0
    %v832 = vpop.f32.mrb[0].mxu0
    %833 = vdwg.mxu0
    %v834 = vadd.f32 %v747, %v787
    %v835 = vadd.f32 %v748, %v789
    %v836 = vadd.f32 %v749, %v828
    %v837 = vadd.f32 %v750, %v830
    %v838 = vxor.u32 %v834, 2147483648
    %v839 = vmul.f32 %v838, 1.442695
    %v840 = vpow.pop %v839
    %v841 = vadd.f32 %v840, 1.0
    %v842 = vrcp.pop %v841
    %v843 = vmul.f32 1.0, %v842
    %v844 = vxor.u32 %v835, 2147483648
    %v845 = vmul.f32 %v844, 1.442695
    %v846 = vpow.pop %v845
    %v847 = vadd.f32 %v846, 1.0
    %v848 = vrcp.pop %v847
    %v849 = vmul.f32 1.0, %v848
    %v850 = vtanh.pop %v836
    %v851 = vxor.u32 %v837, 2147483648
    %v852 = vmul.f32 %v851, 1.442695
    %v853 = vpow.pop %v852
    %v854 = vadd.f32 %v853, 1.0
    %v855 = vrcp.pop %v854
    %v856 = vmul.f32 1.0, %v855
    %v857 = vmul.f32 %v849, %v744
    %v858 = vmul.f32 %v843, %v850
    %v859 = vadd.f32 %v857, %v858
    %v860 = vtanh.pop %v859
    %v861 = vmul.f32 %v856, %v860
    %v862 = vld [vmem:[#allocation2 + $0x60] sm:$0xff]
    %v863 = vld [vmem:[#allocation2 + $0x68] sm:$0xff]
    %v864 = vld [vmem:[#allocation2 + $0x70] sm:$0xff]
    %v865 = vld [vmem:[#allocation2 + $0x78] sm:$0xff]
    %v866 = vpack.c.bf16 %v861, %v861
    %867 = vmatprep.subr.bf16.mxu0 %v459
    %868 = vmatpush1.bf16.msra.mxu0 %v458
    %869 = vmatprep.subr.bf16.mxu0 %v463
    %870 = vmatpush1.bf16.msra.mxu0 %v462
    %871 = vmatprep.subr.bf16.mxu0 %v467
    %872 = vmatpush1.bf16.msra.mxu0 %v466
    %873 = vmatprep.subr.bf16.mxu0 %v471
    %874 = vmatpush1.bf16.msra.mxu0 %v470
    %875 = vmatprep.subr.bf16.mxu0 %v475
    %876 = vmatpush1.bf16.msra.mxu0 %v474
    %877 = vmatprep.subr.bf16.mxu0 %v479
    %878 = vmatpush1.bf16.msra.mxu0 %v478
    %879 = vmatprep.subr.bf16.mxu0 %v483
    %880 = vmatpush1.bf16.msra.mxu0 %v482
    %881 = vmatprep.subr.bf16.mxu0 %v487
    %882 = vmatpush1.bf16.msra.mxu0 %v486
    %883 = vmatprep.subr.bf16.mxu0 0
    %884 = vmatpush1.bf16.msra.mxu0 0
    %885 = vmatprep.subr.bf16.mxu0 0
    %886 = vmatpush1.bf16.msra.mxu0 0
    %887 = vmatprep.subr.bf16.mxu0 0
    %888 = vmatpush1.bf16.msra.mxu0 0
    %889 = vmatprep.subr.bf16.mxu0 0
    %890 = vmatpush1.bf16.msra.mxu0 0
    %891 = vmatprep.subr.bf16.mxu0 0
    %892 = vmatpush1.bf16.msra.mxu0 0
    %893 = vmatprep.subr.bf16.mxu0 0
    %894 = vmatpush1.bf16.msra.mxu0 0
    %895 = vmatprep.subr.bf16.mxu0 0
    %896 = vmatpush1.bf16.msra.mxu0 0
    %897 = vmatprep.subr.bf16.mxu0 0
    %898 = vmatpush1.bf16.msra.mxu0 0
    %899 = vmatprep.mubr.bf16.mxu0 0
    %900 = vmatmul.mubr.bf16.gmra.mrb[0].mxu0 %v866
    %v901 = vpop.f32.mrb[0].mxu0
    %v902 = vadd.f32 0.0, %v901
    %v903 = vpop.f32.mrb[0].mxu0
    %v904 = vadd.f32 0.0, %v903
    %v905 = vpop.f32.mrb[0].mxu0
    %v906 = vpop.f32.mrb[0].mxu0
    %907 = vdwg.mxu0
    %908 = vmatprep.subr.bf16.mxu0 %v461
    %909 = vmatpush1.bf16.msra.mxu0 %v460
    %910 = vmatprep.subr.bf16.mxu0 %v465
    %911 = vmatpush1.bf16.msra.mxu0 %v464
    %912 = vmatprep.subr.bf16.mxu0 %v469
    %913 = vmatpush1.bf16.msra.mxu0 %v468
    %914 = vmatprep.subr.bf16.mxu0 %v473
    %915 = vmatpush1.bf16.msra.mxu0 %v472
    %916 = vmatprep.subr.bf16.mxu0 %v477
    %917 = vmatpush1.bf16.msra.mxu0 %v476
    %918 = vmatprep.subr.bf16.mxu0 %v481
    %919 = vmatpush1.bf16.msra.mxu0 %v480
    %920 = vmatprep.subr.bf16.mxu0 %v485
    %921 = vmatpush1.bf16.msra.mxu0 %v484
    %922 = vmatprep.subr.bf16.mxu0 %v489
    %923 = vmatpush1.bf16.msra.mxu0 %v488
    %924 = vmatprep.subr.bf16.mxu0 0
    %925 = vmatpush1.bf16.msra.mxu0 0
    %926 = vmatprep.subr.bf16.mxu0 0
    %927 = vmatpush1.bf16.msra.mxu0 0
    %928 = vmatprep.subr.bf16.mxu0 0
    %929 = vmatpush1.bf16.msra.mxu0 0
    %930 = vmatprep.subr.bf16.mxu0 0
    %931 = vmatpush1.bf16.msra.mxu0 0
    %932 = vmatprep.subr.bf16.mxu0 0
    %933 = vmatpush1.bf16.msra.mxu0 0
    %934 = vmatprep.subr.bf16.mxu0 0
    %935 = vmatpush1.bf16.msra.mxu0 0
    %936 = vmatprep.subr.bf16.mxu0 0
    %937 = vmatpush1.bf16.msra.mxu0 0
    %938 = vmatprep.subr.bf16.mxu0 0
    %939 = vmatpush1.bf16.msra.mxu0 0
    %940 = vmatprep.mubr.bf16.mxu0 0
    %941 = vmatmul.mubr.bf16.gmra.mrb[0].mxu0 %v866
    %v942 = vpop.f32.mrb[0].mxu0
    %v943 = vadd.f32 0.0, %v942
    %v944 = vpop.f32.mrb[0].mxu0
    %v945 = vadd.f32 0.0, %v944
    %v946 = vpop.f32.mrb[0].mxu0
    %v947 = vpop.f32.mrb[0].mxu0
    %948 = vdwg.mxu0
    %v949 = vadd.f32 %v862, %v902
    %v950 = vadd.f32 %v863, %v904
    %v951 = vadd.f32 %v864, %v943
    %v952 = vadd.f32 %v865, %v945
    %v953 = vxor.u32 %v949, 2147483648
    %v954 = vmul.f32 %v953, 1.442695
    %v955 = vpow.pop %v954
    %v956 = vadd.f32 %v955, 1.0
    %v957 = vrcp.pop %v956
    %v958 = vmul.f32 1.0, %v957
    %v959 = vxor.u32 %v950, 2147483648
    %v960 = vmul.f32 %v959, 1.442695
    %v961 = vpow.pop %v960
    %v962 = vadd.f32 %v961, 1.0
    %v963 = vrcp.pop %v962
    %v964 = vmul.f32 1.0, %v963
    %v965 = vtanh.pop %v951
    %v966 = vxor.u32 %v952, 2147483648
    %v967 = vmul.f32 %v966, 1.442695
    %v968 = vpow.pop %v967
    %v969 = vadd.f32 %v968, 1.0
    %v970 = vrcp.pop %v969
    %v971 = vmul.f32 1.0, %v970
    %v972 = vmul.f32 %v964, %v859
    %v973 = vmul.f32 %v958, %v965
    %v974 = vadd.f32 %v972, %v973
    %v975 = vtanh.pop %v974
    %v976 = vmul.f32 %v971, %v975
    %v977 = vld [vmem:[#allocation2 + $0x80] sm:$0xff]
    %v978 = vld [vmem:[#allocation2 + $0x88] sm:$0xff]
    %v979 = vld [vmem:[#allocation2 + $0x90] sm:$0xff]
    %v980 = vld [vmem:[#allocation2 + $0x98] sm:$0xff]
    %v981 = vpack.c.bf16 %v976, %v976
    %982 = vmatprep.subr.bf16.mxu0 %v459
    %983 = vmatpush1.bf16.msra.mxu0 %v458
    %984 = vmatprep.subr.bf16.mxu0 %v463
    %985 = vmatpush1.bf16.msra.mxu0 %v462
    %986 = vmatprep.subr.bf16.mxu0 %v467
    %987 = vmatpush1.bf16.msra.mxu0 %v466
    %988 = vmatprep.subr.bf16.mxu0 %v471
    %989 = vmatpush1.bf16.msra.mxu0 %v470
    %990 = vmatprep.subr.bf16.mxu0 %v475
    %991 = vmatpush1.bf16.msra.mxu0 %v474
    %992 = vmatprep.subr.bf16.mxu0 %v479
    %993 = vmatpush1.bf16.msra.mxu0 %v478
    %994 = vmatprep.subr.bf16.mxu0 %v483
    %995 = vmatpush1.bf16.msra.mxu0 %v482
    %996 = vmatprep.subr.bf16.mxu0 %v487
    %997 = vmatpush1.bf16.msra.mxu0 %v486
    %998 = vmatprep.subr.bf16.mxu0 0
    %999 = vmatpush1.bf16.msra.mxu0 0
    %1000 = vmatprep.subr.bf16.mxu0 0
    %1001 = vmatpush1.bf16.msra.mxu0 0
    %1002 = vmatprep.subr.bf16.mxu0 0
    %1003 = vmatpush1.bf16.msra.mxu0 0
    %1004 = vmatprep.subr.bf16.mxu0 0
    %1005 = vmatpush1.bf16.msra.mxu0 0
    %1006 = vmatprep.subr.bf16.mxu0 0
    %1007 = vmatpush1.bf16.msra.mxu0 0
    %1008 = vmatprep.subr.bf16.mxu0 0
    %1009 = vmatpush1.bf16.msra.mxu0 0
    %1010 = vmatprep.subr.bf16.mxu0 0
    %1011 = vmatpush1.bf16.msra.mxu0 0
    %1012 = vmatprep.subr.bf16.mxu0 0
    %1013 = vmatpush1.bf16.msra.mxu0 0
    %1014 = vmatprep.mubr.bf16.mxu0 0
    %1015 = vmatmul.mubr.bf16.gmra.mrb[0].mxu0 %v981
    %v1016 = vpop.f32.mrb[0].mxu0
    %v1017 = vadd.f32 0.0, %v1016
    %v1018 = vpop.f32.mrb[0].mxu0
    %v1019 = vadd.f32 0.0, %v1018
    %v1020 = vpop.f32.mrb[0].mxu0
    %v1021 = vpop.f32.mrb[0].mxu0
    %1022 = vdwg.mxu0
    %1023 = vmatprep.subr.bf16.mxu0 %v461
    %1024 = vmatpush1.bf16.msra.mxu0 %v460
    %1025 = vmatprep.subr.bf16.mxu0 %v465
    %1026 = vmatpush1.bf16.msra.mxu0 %v464
    %1027 = vmatprep.subr.bf16.mxu0 %v469
    %1028 = vmatpush1.bf16.msra.mxu0 %v468
    %1029 = vmatprep.subr.bf16.mxu0 %v473
    %1030 = vmatpush1.bf16.msra.mxu0 %v472
    %1031 = vmatprep.subr.bf16.mxu0 %v477
    %1032 = vmatpush1.bf16.msra.mxu0 %v476
    %1033 = vmatprep.subr.bf16.mxu0 %v481
    %1034 = vmatpush1.bf16.msra.mxu0 %v480
    %1035 = vmatprep.subr.bf16.mxu0 %v485
    %1036 = vmatpush1.bf16.msra.mxu0 %v484
    %1037 = vmatprep.subr.bf16.mxu0 %v489
    %1038 = vmatpush1.bf16.msra.mxu0 %v488
    %1039 = vmatprep.subr.bf16.mxu0 0
    %1040 = vmatpush1.bf16.msra.mxu0 0
    %1041 = vmatprep.subr.bf16.mxu0 0
    %1042 = vmatpush1.bf16.msra.mxu0 0
    %1043 = vmatprep.subr.bf16.mxu0 0
    %1044 = vmatpush1.bf16.msra.mxu0 0
    %1045 = vmatprep.subr.bf16.mxu0 0
    %1046 = vmatpush1.bf16.msra.mxu0 0
    %1047 = vmatprep.subr.bf16.mxu0 0
    %1048 = vmatpush1.bf16.msra.mxu0 0
    %1049 = vmatprep.subr.bf16.mxu0 0
    %1050 = vmatpush1.bf16.msra.mxu0 0
    %1051 = vmatprep.subr.bf16.mxu0 0
    %1052 = vmatpush1.bf16.msra.mxu0 0
    %1053 = vmatprep.subr.bf16.mxu0 0
    %1054 = vmatpush1.bf16.msra.mxu0 0
    %1055 = vmatprep.mubr.bf16.mxu0 0
    %1056 = vmatmul.mubr.bf16.gmra.mrb[0].mxu0 %v981
    %v1057 = vpop.f32.mrb[0].mxu0
    %v1058 = vadd.f32 0.0, %v1057
    %v1059 = vpop.f32.mrb[0].mxu0
    %v1060 = vadd.f32 0.0, %v1059
    %v1061 = vpop.f32.mrb[0].mxu0
    %v1062 = vpop.f32.mrb[0].mxu0
    %1063 = vdwg.mxu0
    %v1064 = vadd.f32 %v977, %v1017
    %v1065 = vadd.f32 %v978, %v1019
    %v1066 = vadd.f32 %v979, %v1058
    %v1067 = vadd.f32 %v980, %v1060
    %v1068 = vxor.u32 %v1064, 2147483648
    %v1069 = vmul.f32 %v1068, 1.442695
    %v1070 = vpow.pop %v1069
    %v1071 = vadd.f32 %v1070, 1.0
    %v1072 = vrcp.pop %v1071
    %v1073 = vmul.f32 1.0, %v1072
    %v1074 = vxor.u32 %v1065, 2147483648
    %v1075 = vmul.f32 %v1074, 1.442695
    %v1076 = vpow.pop %v1075
    %v1077 = vadd.f32 %v1076, 1.0
    %v1078 = vrcp.pop %v1077
    %v1079 = vmul.f32 1.0, %v1078
    %v1080 = vtanh.pop %v1066
    %v1081 = vxor.u32 %v1067, 2147483648
    %v1082 = vmul.f32 %v1081, 1.442695
    %v1083 = vpow.pop %v1082
    %v1084 = vadd.f32 %v1083, 1.0
    %v1085 = vrcp.pop %v1084
    %v1086 = vmul.f32 1.0, %v1085
    %v1087 = vmul.f32 %v1079, %v974
    %v1088 = vmul.f32 %v1073, %v1080
    %v1089 = vadd.f32 %v1087, %v1088
    %v1090 = vtanh.pop %v1089
    %v1091 = vmul.f32 %v1086, %v1090
    %v1092 = vld [vmem:[#allocation2 + $0xa0] sm:$0xff]
    %v1093 = vld [vmem:[#allocation2 + $0xa8] sm:$0xff]
    %v1094 = vld [vmem:[#allocation2 + $0xb0] sm:$0xff]
    %v1095 = vld [vmem:[#allocation2 + $0xb8] sm:$0xff]
    %v1096 = vpack.c.bf16 %v1091, %v1091
    %1097 = vmatprep.subr.bf16.mxu0 %v459
    %1098 = vmatpush1.bf16.msra.mxu0 %v458
    %1099 = vmatprep.subr.bf16.mxu0 %v463
    %1100 = vmatpush1.bf16.msra.mxu0 %v462
    %1101 = vmatprep.subr.bf16.mxu0 %v467
    %1102 = vmatpush1.bf16.msra.mxu0 %v466
    %1103 = vmatprep.subr.bf16.mxu0 %v471
    %1104 = vmatpush1.bf16.msra.mxu0 %v470
    %1105 = vmatprep.subr.bf16.mxu0 %v475
    %1106 = vmatpush1.bf16.msra.mxu0 %v474
    %1107 = vmatprep.subr.bf16.mxu0 %v479
    %1108 = vmatpush1.bf16.msra.mxu0 %v478
    %1109 = vmatprep.subr.bf16.mxu0 %v483
    %1110 = vmatpush1.bf16.msra.mxu0 %v482
    %1111 = vmatprep.subr.bf16.mxu0 %v487
    %1112 = vmatpush1.bf16.msra.mxu0 %v486
    %1113 = vmatprep.subr.bf16.mxu0 0
    %1114 = vmatpush1.bf16.msra.mxu0 0
    %1115 = vmatprep.subr.bf16.mxu0 0
    %1116 = vmatpush1.bf16.msra.mxu0 0
    %1117 = vmatprep.subr.bf16.mxu0 0
    %1118 = vmatpush1.bf16.msra.mxu0 0
    %1119 = vmatprep.subr.bf16.mxu0 0
    %1120 = vmatpush1.bf16.msra.mxu0 0
    %1121 = vmatprep.subr.bf16.mxu0 0
    %1122 = vmatpush1.bf16.msra.mxu0 0
    %1123 = vmatprep.subr.bf16.mxu0 0
    %1124 = vmatpush1.bf16.msra.mxu0 0
    %1125 = vmatprep.subr.bf16.mxu0 0
    %1126 = vmatpush1.bf16.msra.mxu0 0
    %1127 = vmatprep.subr.bf16.mxu0 0
    %1128 = vmatpush1.bf16.msra.mxu0 0
    %1129 = vmatprep.mubr.bf16.mxu0 0
    %1130 = vmatmul.mubr.bf16.gmra.mrb[0].mxu0 %v1096
    %v1131 = vpop.f32.mrb[0].mxu0
    %v1132 = vadd.f32 0.0, %v1131
    %v1133 = vpop.f32.mrb[0].mxu0
    %v1134 = vadd.f32 0.0, %v1133
    %v1135 = vpop.f32.mrb[0].mxu0
    %v1136 = vpop.f32.mrb[0].mxu0
    %1137 = vdwg.mxu0
    %1138 = vmatprep.subr.bf16.mxu0 %v461
    %1139 = vmatpush1.bf16.msra.mxu0 %v460
    %1140 = vmatprep.subr.bf16.mxu0 %v465
    %1141 = vmatpush1.bf16.msra.mxu0 %v464
    %1142 = vmatprep.subr.bf16.mxu0 %v469
    %1143 = vmatpush1.bf16.msra.mxu0 %v468
    %1144 = vmatprep.subr.bf16.mxu0 %v473
    %1145 = vmatpush1.bf16.msra.mxu0 %v472
    %1146 = vmatprep.subr.bf16.mxu0 %v477
    %1147 = vmatpush1.bf16.msra.mxu0 %v476
    %1148 = vmatprep.subr.bf16.mxu0 %v481
    %1149 = vmatpush1.bf16.msra.mxu0 %v480
    %1150 = vmatprep.subr.bf16.mxu0 %v485
    %1151 = vmatpush1.bf16.msra.mxu0 %v484
    %1152 = vmatprep.subr.bf16.mxu0 %v489
    %1153 = vmatpush1.bf16.msra.mxu0 %v488
    %1154 = vmatprep.subr.bf16.mxu0 0
    %1155 = vmatpush1.bf16.msra.mxu0 0
    %1156 = vmatprep.subr.bf16.mxu0 0
    %1157 = vmatpush1.bf16.msra.mxu0 0
    %1158 = vmatprep.subr.bf16.mxu0 0
    %1159 = vmatpush1.bf16.msra.mxu0 0
    %1160 = vmatprep.subr.bf16.mxu0 0
    %1161 = vmatpush1.bf16.msra.mxu0 0
    %1162 = vmatprep.subr.bf16.mxu0 0
    %1163 = vmatpush1.bf16.msra.mxu0 0
    %1164 = vmatprep.subr.bf16.mxu0 0
    %1165 = vmatpush1.bf16.msra.mxu0 0
    %1166 = vmatprep.subr.bf16.mxu0 0
    %1167 = vmatpush1.bf16.msra.mxu0 0
    %1168 = vmatprep.subr.bf16.mxu0 0
    %1169 = vmatpush1.bf16.msra.mxu0 0
    %1170 = vmatprep.mubr.bf16.mxu0 0
    %1171 = vmatmul.mubr.bf16.gmra.mrb[0].mxu0 %v1096
    %v1172 = vpop.f32.mrb[0].mxu0
    %v1173 = vadd.f32 0.0, %v1172
    %v1174 = vpop.f32.mrb[0].mxu0
    %v1175 = vadd.f32 0.0, %v1174
    %v1176 = vpop.f32.mrb[0].mxu0
    %v1177 = vpop.f32.mrb[0].mxu0
    %1178 = vdwg.mxu0
    %v1179 = vadd.f32 %v1092, %v1132
    %v1180 = vadd.f32 %v1093, %v1134
    %v1181 = vadd.f32 %v1094, %v1173
    %v1182 = vadd.f32 %v1095, %v1175
    %v1183 = vxor.u32 %v1179, 2147483648
    %v1184 = vmul.f32 %v1183, 1.442695
    %v1185 = vpow.pop %v1184
    %v1186 = vadd.f32 %v1185, 1.0
    %v1187 = vrcp.pop %v1186
    %v1188 = vmul.f32 1.0, %v1187
    %v1189 = vxor.u32 %v1180, 2147483648
    %v1190 = vmul.f32 %v1189, 1.442695
    %v1191 = vpow.pop %v1190
    %v1192 = vadd.f32 %v1191, 1.0
    %v1193 = vrcp.pop %v1192
    %v1194 = vmul.f32 1.0, %v1193
    %v1195 = vtanh.pop %v1181
    %v1196 = vxor.u32 %v1182, 2147483648
    %v1197 = vmul.f32 %v1196, 1.442695
    %v1198 = vpow.pop %v1197
    %v1199 = vadd.f32 %v1198, 1.0
    %v1200 = vrcp.pop %v1199
    %v1201 = vmul.f32 1.0, %v1200
    %v1202 = vmul.f32 %v1194, %v1089
    %v1203 = vmul.f32 %v1188, %v1195
    %v1204 = vadd.f32 %v1202, %v1203
    %v1205 = vtanh.pop %v1204
    %v1206 = vmul.f32 %v1201, %v1205
    %v1207 = vld [vmem:[#allocation2 + $0xc0] sm:$0xff]
    %v1208 = vld [vmem:[#allocation2 + $0xc8] sm:$0xff]
    %v1209 = vld [vmem:[#allocation2 + $0xd0] sm:$0xff]
    %v1210 = vld [vmem:[#allocation2 + $0xd8] sm:$0xff]
    %v1211 = vpack.c.bf16 %v1206, %v1206
    %1212 = vmatprep.subr.bf16.mxu0 %v459
    %1213 = vmatpush1.bf16.msra.mxu0 %v458
    %1214 = vmatprep.subr.bf16.mxu0 %v463
    %1215 = vmatpush1.bf16.msra.mxu0 %v462
    %1216 = vmatprep.subr.bf16.mxu0 %v467
    %1217 = vmatpush1.bf16.msra.mxu0 %v466
    %1218 = vmatprep.subr.bf16.mxu0 %v471
    %1219 = vmatpush1.bf16.msra.mxu0 %v470
    %1220 = vmatprep.subr.bf16.mxu0 %v475
    %1221 = vmatpush1.bf16.msra.mxu0 %v474
    %1222 = vmatprep.subr.bf16.mxu0 %v479
    %1223 = vmatpush1.bf16.msra.mxu0 %v478
    %1224 = vmatprep.subr.bf16.mxu0 %v483
    %1225 = vmatpush1.bf16.msra.mxu0 %v482
    %1226 = vmatprep.subr.bf16.mxu0 %v487
    %1227 = vmatpush1.bf16.msra.mxu0 %v486
    %1228 = vmatprep.subr.bf16.mxu0 0
    %1229 = vmatpush1.bf16.msra.mxu0 0
    %1230 = vmatprep.subr.bf16.mxu0 0
    %1231 = vmatpush1.bf16.msra.mxu0 0
    %1232 = vmatprep.subr.bf16.mxu0 0
    %1233 = vmatpush1.bf16.msra.mxu0 0
    %1234 = vmatprep.subr.bf16.mxu0 0
    %1235 = vmatpush1.bf16.msra.mxu0 0
    %1236 = vmatprep.subr.bf16.mxu0 0
    %1237 = vmatpush1.bf16.msra.mxu0 0
    %1238 = vmatprep.subr.bf16.mxu0 0
    %1239 = vmatpush1.bf16.msra.mxu0 0
    %1240 = vmatprep.subr.bf16.mxu0 0
    %1241 = vmatpush1.bf16.msra.mxu0 0
    %1242 = vmatprep.subr.bf16.mxu0 0
    %1243 = vmatpush1.bf16.msra.mxu0 0
    %1244 = vmatprep.mubr.bf16.mxu0 0
    %1245 = vmatmul.mubr.bf16.gmra.mrb[0].mxu0 %v1211
    %v1246 = vpop.f32.mrb[0].mxu0
    %v1247 = vadd.f32 0.0, %v1246
    %v1248 = vpop.f32.mrb[0].mxu0
    %v1249 = vadd.f32 0.0, %v1248
    %v1250 = vpop.f32.mrb[0].mxu0
    %v1251 = vpop.f32.mrb[0].mxu0
    %1252 = vdwg.mxu0
    %1253 = vmatprep.subr.bf16.mxu0 %v461
    %1254 = vmatpush1.bf16.msra.mxu0 %v460
    %1255 = vmatprep.subr.bf16.mxu0 %v465
    %1256 = vmatpush1.bf16.msra.mxu0 %v464
    %1257 = vmatprep.subr.bf16.mxu0 %v469
    %1258 = vmatpush1.bf16.msra.mxu0 %v468
    %1259 = vmatprep.subr.bf16.mxu0 %v473
    %1260 = vmatpush1.bf16.msra.mxu0 %v472
    %1261 = vmatprep.subr.bf16.mxu0 %v477
    %1262 = vmatpush1.bf16.msra.mxu0 %v476
    %1263 = vmatprep.subr.bf16.mxu0 %v481
    %1264 = vmatpush1.bf16.msra.mxu0 %v480
    %1265 = vmatprep.subr.bf16.mxu0 %v485
    %1266 = vmatpush1.bf16.msra.mxu0 %v484
    %1267 = vmatprep.subr.bf16.mxu0 %v489
    %1268 = vmatpush1.bf16.msra.mxu0 %v488
    %1269 = vmatprep.subr.bf16.mxu0 0
    %1270 = vmatpush1.bf16.msra.mxu0 0
    %1271 = vmatprep.subr.bf16.mxu0 0
    %1272 = vmatpush1.bf16.msra.mxu0 0
    %1273 = vmatprep.subr.bf16.mxu0 0
    %1274 = vmatpush1.bf16.msra.mxu0 0
    %1275 = vmatprep.subr.bf16.mxu0 0
    %1276 = vmatpush1.bf16.msra.mxu0 0
    %1277 = vmatprep.subr.bf16.mxu0 0
    %1278 = vmatpush1.bf16.msra.mxu0 0
    %1279 = vmatprep.subr.bf16.mxu0 0
    %1280 = vmatpush1.bf16.msra.mxu0 0
    %1281 = vmatprep.subr.bf16.mxu0 0
    %1282 = vmatpush1.bf16.msra.mxu0 0
    %1283 = vmatprep.subr.bf16.mxu0 0
    %1284 = vmatpush1.bf16.msra.mxu0 0
    %1285 = vmatprep.mubr.bf16.mxu0 0
    %1286 = vmatmul.mubr.bf16.gmra.mrb[0].mxu0 %v1211
    %v1287 = vpop.f32.mrb[0].mxu0
    %v1288 = vadd.f32 0.0, %v1287
    %v1289 = vpop.f32.mrb[0].mxu0
    %v1290 = vadd.f32 0.0, %v1289
    %v1291 = vpop.f32.mrb[0].mxu0
    %v1292 = vpop.f32.mrb[0].mxu0
    %1293 = vdwg.mxu0
    %v1294 = vadd.f32 %v1207, %v1247
    %v1295 = vadd.f32 %v1208, %v1249
    %v1296 = vadd.f32 %v1209, %v1288
    %v1297 = vadd.f32 %v1210, %v1290
    %v1298 = vxor.u32 %v1294, 2147483648
    %v1299 = vmul.f32 %v1298, 1.442695
    %v1300 = vpow.pop %v1299
    %v1301 = vadd.f32 %v1300, 1.0
    %v1302 = vrcp.pop %v1301
    %v1303 = vmul.f32 1.0, %v1302
    %v1304 = vxor.u32 %v1295, 2147483648
    %v1305 = vmul.f32 %v1304, 1.442695
    %v1306 = vpow.pop %v1305
    %v1307 = vadd.f32 %v1306, 1.0
    %v1308 = vrcp.pop %v1307
    %v1309 = vmul.f32 1.0, %v1308
    %v1310 = vtanh.pop %v1296
    %v1311 = vxor.u32 %v1297, 2147483648
    %v1312 = vmul.f32 %v1311, 1.442695
    %v1313 = vpow.pop %v1312
    %v1314 = vadd.f32 %v1313, 1.0
    %v1315 = vrcp.pop %v1314
    %v1316 = vmul.f32 1.0, %v1315
    %v1317 = vmul.f32 %v1309, %v1204
    %v1318 = vmul.f32 %v1303, %v1310
    %v1319 = vadd.f32 %v1317, %v1318
    %v1320 = vtanh.pop %v1319
    %v1321 = vmul.f32 %v1316, %v1320
    %v1322 = vld [vmem:[#allocation2 + $0xe0] sm:$0xff]
    %v1323 = vld [vmem:[#allocation2 + $0xe8] sm:$0xff]
    %v1324 = vld [vmem:[#allocation2 + $0xf0] sm:$0xff]
    %v1325 = vld [vmem:[#allocation2 + $0xf8] sm:$0xff]
    %v1326 = vpack.c.bf16 %v1321, %v1321
    %1327 = vmatprep.subr.bf16.mxu0 %v459
    %1328 = vmatpush1.bf16.msra.mxu0 %v458
    %1329 = vmatprep.subr.bf16.mxu0 %v463
    %1330 = vmatpush1.bf16.msra.mxu0 %v462
    %1331 = vmatprep.subr.bf16.mxu0 %v467
    %1332 = vmatpush1.bf16.msra.mxu0 %v466
    %1333 = vmatprep.subr.bf16.mxu0 %v471
    %1334 = vmatpush1.bf16.msra.mxu0 %v470
    %1335 = vmatprep.subr.bf16.mxu0 %v475
    %1336 = vmatpush1.bf16.msra.mxu0 %v474
    %1337 = vmatprep.subr.bf16.mxu0 %v479
    %1338 = vmatpush1.bf16.msra.mxu0 %v478
    %1339 = vmatprep.subr.bf16.mxu0 %v483
    %1340 = vmatpush1.bf16.msra.mxu0 %v482
    %1341 = vmatprep.subr.bf16.mxu0 %v487
    %1342 = vmatpush1.bf16.msra.mxu0 %v486
    %1343 = vmatprep.subr.bf16.mxu0 0
    %1344 = vmatpush1.bf16.msra.mxu0 0
    %1345 = vmatprep.subr.bf16.mxu0 0
    %1346 = vmatpush1.bf16.msra.mxu0 0
    %1347 = vmatprep.subr.bf16.mxu0 0
    %1348 = vmatpush1.bf16.msra.mxu0 0
    %1349 = vmatprep.subr.bf16.mxu0 0
    %1350 = vmatpush1.bf16.msra.mxu0 0
    %1351 = vmatprep.subr.bf16.mxu0 0
    %1352 = vmatpush1.bf16.msra.mxu0 0
    %1353 = vmatprep.subr.bf16.mxu0 0
    %1354 = vmatpush1.bf16.msra.mxu0 0
    %1355 = vmatprep.subr.bf16.mxu0 0
    %1356 = vmatpush1.bf16.msra.mxu0 0
    %1357 = vmatprep.subr.bf16.mxu0 0
    %1358 = vmatpush1.bf16.msra.mxu0 0
    %1359 = vmatprep.mubr.bf16.mxu0 0
    %1360 = vmatmul.mubr.bf16.gmra.mrb[0].mxu0 %v1326
    %v1361 = vpop.f32.mrb[0].mxu0
    %v1362 = vadd.f32 0.0, %v1361
    %v1363 = vpop.f32.mrb[0].mxu0
    %v1364 = vadd.f32 0.0, %v1363
    %v1365 = vpop.f32.mrb[0].mxu0
    %v1366 = vpop.f32.mrb[0].mxu0
    %1367 = vdwg.mxu0
    %1368 = vmatprep.subr.bf16.mxu0 %v461
    %1369 = vmatpush1.bf16.msra.mxu0 %v460
    %1370 = vmatprep.subr.bf16.mxu0 %v465
    %1371 = vmatpush1.bf16.msra.mxu0 %v464
    %1372 = vmatprep.subr.bf16.mxu0 %v469
    %1373 = vmatpush1.bf16.msra.mxu0 %v468
    %1374 = vmatprep.subr.bf16.mxu0 %v473
    %1375 = vmatpush1.bf16.msra.mxu0 %v472
    %1376 = vmatprep.subr.bf16.mxu0 %v477
    %1377 = vmatpush1.bf16.msra.mxu0 %v476
    %1378 = vmatprep.subr.bf16.mxu0 %v481
    %1379 = vmatpush1.bf16.msra.mxu0 %v480
    %1380 = vmatprep.subr.bf16.mxu0 %v485
    %1381 = vmatpush1.bf16.msra.mxu0 %v484
    %1382 = vmatprep.subr.bf16.mxu0 %v489
    %1383 = vmatpush1.bf16.msra.mxu0 %v488
    %1384 = vmatprep.subr.bf16.mxu0 0
    %1385 = vmatpush1.bf16.msra.mxu0 0
    %1386 = vmatprep.subr.bf16.mxu0 0
    %1387 = vmatpush1.bf16.msra.mxu0 0
    %1388 = vmatprep.subr.bf16.mxu0 0
    %1389 = vmatpush1.bf16.msra.mxu0 0
    %1390 = vmatprep.subr.bf16.mxu0 0
    %1391 = vmatpush1.bf16.msra.mxu0 0
    %1392 = vmatprep.subr.bf16.mxu0 0
    %1393 = vmatpush1.bf16.msra.mxu0 0
    %1394 = vmatprep.subr.bf16.mxu0 0
    %1395 = vmatpush1.bf16.msra.mxu0 0
    %1396 = vmatprep.subr.bf16.mxu0 0
    %1397 = vmatpush1.bf16.msra.mxu0 0
    %1398 = vmatprep.subr.bf16.mxu0 0
    %1399 = vmatpush1.bf16.msra.mxu0 0
    %1400 = vmatprep.mubr.bf16.mxu0 0
    %1401 = vmatmul.mubr.bf16.gmra.mrb[0].mxu0 %v1326
    %v1402 = vpop.f32.mrb[0].mxu0
    %v1403 = vadd.f32 0.0, %v1402
    %v1404 = vpop.f32.mrb[0].mxu0
    %v1405 = vadd.f32 0.0, %v1404
    %v1406 = vpop.f32.mrb[0].mxu0
    %v1407 = vpop.f32.mrb[0].mxu0
    %1408 = vdwg.mxu0
    %v1409 = vadd.f32 %v1322, %v1362
    %v1410 = vadd.f32 %v1323, %v1364
    %v1411 = vadd.f32 %v1324, %v1403
    %v1412 = vadd.f32 %v1325, %v1405
    %v1413 = vxor.u32 %v1409, 2147483648
    %v1414 = vmul.f32 %v1413, 1.442695
    %v1415 = vpow.pop %v1414
    %v1416 = vadd.f32 %v1415, 1.0
    %v1417 = vrcp.pop %v1416
    %v1418 = vmul.f32 1.0, %v1417
    %v1419 = vxor.u32 %v1410, 2147483648
    %v1420 = vmul.f32 %v1419, 1.442695
    %v1421 = vpow.pop %v1420
    %v1422 = vadd.f32 %v1421, 1.0
    %v1423 = vrcp.pop %v1422
    %v1424 = vmul.f32 1.0, %v1423
    %v1425 = vtanh.pop %v1411
    %v1426 = vxor.u32 %v1412, 2147483648
    %v1427 = vmul.f32 %v1426, 1.442695
    %v1428 = vpow.pop %v1427
    %v1429 = vadd.f32 %v1428, 1.0
    %v1430 = vrcp.pop %v1429
    %v1431 = vmul.f32 1.0, %v1430
    %v1432 = vmul.f32 %v1424, %v1319
    %v1433 = vmul.f32 %v1418, %v1425
    %v1434 = vadd.f32 %v1432, %v1433
    %v1435 = vtanh.pop %v1434
    %v1436 = vmul.f32 %v1431, %v1435
    %v1437 = vpack.c.bf16 %v1436, %v1436
    %v1438 = vld [vmem:[#allocation6] sm:$0xf]
    %v1439 = vld [vmem:[#allocation6 + $0x4] sm:$0xf]
    %v1440 = vld [vmem:[#allocation6 + $0x8] sm:$0xf]
    %v1441 = vld [vmem:[#allocation6 + $0xc] sm:$0xf]
    %v1442 = vld [vmem:[#allocation6 + $0x10] sm:$0xf]
    %v1443 = vld [vmem:[#allocation6 + $0x14] sm:$0xf]
    %v1444 = vld [vmem:[#allocation6 + $0x18] sm:$0xf]
    %v1445 = vld [vmem:[#allocation6 + $0x1c] sm:$0xf]
    %v1446 = vld [vmem:[#allocation6 + $0x20] sm:$0xf]
    %v1447 = vld [vmem:[#allocation6 + $0x24] sm:$0xf]
    %v1448 = vld [vmem:[#allocation6 + $0x28] sm:$0xf]
    %v1449 = vld [vmem:[#allocation6 + $0x2c] sm:$0xf]
    %v1450 = vld [vmem:[#allocation6 + $0x30] sm:$0xf]
    %v1451 = vld [vmem:[#allocation6 + $0x34] sm:$0xf]
    %v1452 = vld [vmem:[#allocation6 + $0x38] sm:$0xf]
    %v1453 = vld [vmem:[#allocation6 + $0x3c] sm:$0xf]
    %v1454 = vld [vmem:[%s5] sm:$0x1]
    %v1456 = vlaneseq
    %v1457 = vshrl.u32 %v1456, 7
    %v1458 = vsub.s32 0, %v1457
    %v1459 = vrot.slane %v1454, %v1458
    %v1477 = vunpack.c.l.b16 %v1438
    %v1478 = vunpack.c.l.b16 %v1439
    %v1479 = vunpack.c.l.b16 %v1440
    %v1480 = vunpack.c.l.b16 %v1441
    %v1481 = vunpack.c.l.b16 %v1442
    %v1482 = vunpack.c.l.b16 %v1443
    %v1483 = vunpack.c.l.b16 %v1444
    %v1484 = vunpack.c.l.b16 %v1445
    %v1485 = vunpack.c.l.b16 %v1446
    %v1486 = vunpack.c.l.b16 %v1447
    %v1487 = vunpack.c.l.b16 %v1448
    %v1488 = vunpack.c.l.b16 %v1449
    %v1489 = vunpack.c.l.b16 %v1450
    %v1490 = vunpack.c.l.b16 %v1451
    %v1491 = vunpack.c.l.b16 %v1452
    %v1492 = vunpack.c.l.b16 %v1453
    %v1493 = vpack.c.b16 %v1478, %v1477
    %v1494 = vpack.c.b16 %v1480, %v1479
    %v1495 = vpack.c.b16 %v1482, %v1481
    %v1496 = vpack.c.b16 %v1484, %v1483
    %v1497 = vpack.c.b16 %v1486, %v1485
    %v1498 = vpack.c.b16 %v1488, %v1487
    %v1499 = vpack.c.b16 %v1490, %v1489
    %v1500 = vpack.c.b16 %v1492, %v1491
    %1509 = vmatprep.subr.bf16.mxu0 0
    %1510 = vmatpush1.bf16.msra.mxu0 %v1493
    %1511 = vmatprep.subr.bf16.mxu0 0
    %1512 = vmatpush1.bf16.msra.mxu0 %v1494
    %1513 = vmatprep.subr.bf16.mxu0 0
    %1514 = vmatpush1.bf16.msra.mxu0 %v1495
    %1515 = vmatprep.subr.bf16.mxu0 0
    %1516 = vmatpush1.bf16.msra.mxu0 %v1496
    %1517 = vmatprep.subr.bf16.mxu0 0
    %1518 = vmatpush1.bf16.msra.mxu0 %v1497
    %1519 = vmatprep.subr.bf16.mxu0 0
    %1520 = vmatpush1.bf16.msra.mxu0 %v1498
    %1521 = vmatprep.subr.bf16.mxu0 0
    %1522 = vmatpush1.bf16.msra.mxu0 %v1499
    %1523 = vmatprep.subr.bf16.mxu0 0
    %1524 = vmatpush1.bf16.msra.mxu0 %v1500
    %1525 = vmatprep.subr.bf16.mxu0 0
    %1526 = vmatpush1.bf16.msra.mxu0 0
    %1527 = vmatprep.subr.bf16.mxu0 0
    %1528 = vmatpush1.bf16.msra.mxu0 0
    %1529 = vmatprep.subr.bf16.mxu0 0
    %1530 = vmatpush1.bf16.msra.mxu0 0
    %1531 = vmatprep.subr.bf16.mxu0 0
    %1532 = vmatpush1.bf16.msra.mxu0 0
    %1533 = vmatprep.subr.bf16.mxu0 0
    %1534 = vmatpush1.bf16.msra.mxu0 0
    %1535 = vmatprep.subr.bf16.mxu0 0
    %1536 = vmatpush1.bf16.msra.mxu0 0
    %1537 = vmatprep.subr.bf16.mxu0 0
    %1538 = vmatpush1.bf16.msra.mxu0 0
    %1539 = vmatprep.subr.bf16.mxu0 0
    %1540 = vmatpush1.bf16.msra.mxu0 0
    %1541 = vmatprep.mubr.bf16.mxu0 0
    %1542 = vmatmul.mubr.bf16.gmra.mrb[0].mxu0 %v1437
    %v1543 = vpop.f32.mrb[0].mxu0
    %v1544 = vadd.f32 %v1459, %v1543
    %v1545 = vpop.f32.mrb[0].mxu0
    %v1546 = vpop.f32.mrb[0].mxu0
    %v1547 = vpop.f32.mrb[0].mxu0
    %1548 = vdwg.mxu0
    %1549 = vst [vmem:[#allocation8] sm:$0xff] %v1544
    // Predicated region
    $region34: #{tpu_custom_call.1} parent=1 // pred_check
      _
    $region35: #{tpu_custom_call.1} parent=1 // pred_check_branch
      %1551 = sbr.rel (0) target = $region37
    $region36: #{tpu_custom_call.1} parent=1 // pred_region
      %s1553 = ssub.s32 128, 128
      %1554 = vsyncadd [#allocation5], %s1553
      %s1556 = sshll.u32 [#allocation8], 4
      %s1557 = int_to_ptr.vmem [resolvable:$true] %s1556
      %1559 = dma.vmem_to_hbm [thread:$0]  %s1557, 128, %s6, [#allocation5]
    $region37: #{tpu_custom_call.1} parent=1 // pred_fallthru
      _
    // Predicated region
    $region38: #{tpu_custom_call.1} parent=1 // pred_check
      _
    $region39: #{tpu_custom_call.1} parent=1 // pred_check_branch
      %1561 = sbr.rel (0) target = $region41
    $region40: #{tpu_custom_call.1} parent=1 // pred_region
      %1562 = dma.done [#allocation5], 128
    $region41: #{tpu_custom_call.1} parent=1 // pred_fallthru
      _
    %1563 = vsyncpa [#allocation4], 1
    %1564 = vsyncpa [#allocation7], 1
    %1565 = vsyncpa [#allocation5], 1

</llo_original>
